<compile_context>
chip_gen: v7x
topology: tpu7x:2x2x1
jax: 0.10.0
libtpu: 0.0.40
codegen_flags: <defaults>
</compile_context>

<pallas_src>
import jax
import jax.numpy as jnp
from jax.experimental import pallas as pl
from jax.experimental.pallas import tpu as pltpu


def _silu(x):
    # SiLU(x) = x * sigmoid(x); exp on EUP, approx reciprocal on EUP (vrcp).
    return x * pl.reciprocal(1.0 + jnp.exp(-x), approx=True)


def hjb_critic_kernel(xt_ref, w1_ref, b1_ref, w2_ref, b2_ref, w3_ref, b3_ref, o_ref):
    # x^T tile: (obs_dim, TB) f32 -> bf16 for the MXU.  Batch sits on lanes.
    xt = xt_ref[...].astype(jnp.bfloat16)

    # Layer 1: (256, obs_dim) @ (obs_dim, TB) -- bf16 operands, f32 accumulate.
    h1 = jnp.dot(w1_ref[...], xt, preferred_element_type=jnp.float32) + b1_ref[...]
    h1 = _silu(h1)                                                   # (256, TB) f32

    # Layer 2: (256, 256) @ (256, TB)
    h2 = jnp.dot(w2_ref[...], h1.astype(jnp.bfloat16),
                 preferred_element_type=jnp.float32) + b2_ref[...]
    h2 = _silu(h2)                                                   # (256, TB) f32

    # Head (256 -> 1) off the MXU: VPU multiply by the head column + sublane
    # reduce.  Result (1, TB) is lane-dense -> unmasked stores.
    out = jnp.sum(h2 * w3_ref[...], axis=0, keepdims=True) + b3_ref[...]   # (1, TB)
    o_ref[...] = out.astype(o_ref.dtype)


def hjb_critic_forward(x, params, tb_max=1024):
    """x: (B, obs_dim) float32 -> (B,) float32 (the module's squeeze(-1))."""
    w1, b1, w2, b2, w3, b3 = params            # w: (in, out), b: (1, out)
    B, obs_dim = x.shape

    # Batch tile on the lane axis: multiple of 128 lanes, capped at tb_max.
    tb = min(tb_max, ((B + 127) // 128) * 128)
    b_pad = ((B + tb - 1) // tb) * tb
    if b_pad != B:
        x = jnp.pad(x, ((0, b_pad - B), (0, 0)))

    # One-time wrapper-side layout plumbing: batch-on-lanes input, bf16 MXU weights.
    xt  = x.T                                  # (obs_dim, B_pad) f32
    w1t = w1.T.astype(jnp.bfloat16)            # (256, obs_dim)
    w2t = w2.T.astype(jnp.bfloat16)            # (256, 256)
    b1c = b1.T                                 # (256, 1) f32
    b2c = b2.T                                 # (256, 1) f32
    w3c = w3                                   # (256, 1) f32 head column
    b3s = b3                                   # (1, 1)   f32

    out = pl.pallas_call(
        hjb_critic_kernel,
        out_shape=jax.ShapeDtypeStruct((1, b_pad), jnp.float32),
        grid=(b_pad // tb,),
        in_specs=[
            pl.BlockSpec((obs_dim, tb), lambda i: (0, i)),   # x^T: tiled over batch lanes
            pl.BlockSpec(w1t.shape, lambda i: (0, 0)),       # weights/biases VMEM-resident
            pl.BlockSpec(b1c.shape, lambda i: (0, 0)),
            pl.BlockSpec(w2t.shape, lambda i: (0, 0)),
            pl.BlockSpec(b2c.shape, lambda i: (0, 0)),
            pl.BlockSpec(w3c.shape, lambda i: (0, 0)),
            pl.BlockSpec(b3s.shape, lambda i: (0, 0)),
        ],
        out_specs=pl.BlockSpec((1, tb), lambda i: (0, i)),   # lane-dense output row
        compiler_params=pltpu.CompilerParams(
            dimension_semantics=("parallel",)),
    )(xt, w1t, b1c, w2t, b2c, w3c, b3s)

    return out[0, :B]   # drop batch padding + squeeze(-1)


def init_params(key, obs_dim, hidden=256):
    """Deterministic init mimicking nn.Linear default: U(-1/sqrt(fan_in), 1/sqrt(fan_in))."""
    ks = jax.random.split(key, 6)

    def lin(kw, kb, fan_in, fan_out):
        bound = 1.0 / jnp.sqrt(jnp.float32(fan_in))
        w = jax.random.uniform(kw, (fan_in, fan_out), jnp.float32, -bound, bound)
        b = jax.random.uniform(kb, (1, fan_out), jnp.float32, -bound, bound)
        return w, b

    w1, b1 = lin(ks[0], ks[1], obs_dim, hidden)
    w2, b2 = lin(ks[2], ks[3], hidden, hidden)
    w3, b3 = lin(ks[4], ks[5], hidden, 1)
    return (w1, b1, w2, b2, w3, b3)


def reference_forward(x, params):
    """Pure-JAX f32 reference matching the PyTorch module."""
    w1, b1, w2, b2, w3, b3 = params
    h1 = x @ w1 + b1
    h1 = h1 * jax.nn.sigmoid(h1)
    h2 = h1 @ w2 + b2
    h2 = h2 * jax.nn.sigmoid(h2)
    return (h2 @ w3 + b3)[:, 0]


if __name__ == "__main__":
    key = jax.random.PRNGKey(0)
    kp, kx1, kx2 = jax.random.split(key, 3)

    obs_dim = 16  # flattened observation dim (np.prod(observation_space.shape))
    params = init_params(kp, obs_dim)

    # bf16 matmuls + approx reciprocal -> loosened tolerance vs f32 reference.
    TOL = dict(atol=5e-2, rtol=5e-2)

    # Small primary check (single grid step, padded 8 -> 128 batch lanes).
    batch = 8
    x = jax.random.normal(kx1, (batch, obs_dim), jnp.float32)
    out = jax.block_until_ready(hjb_critic_forward(x, params))
    ref = reference_forward(x, params)
    assert out.shape == (batch,), out.shape
    assert jnp.allclose(out, ref, **TOL), (out, ref)

    # Exercise the multi-tile + batch-padding path (3 grid steps at tb=128).
    batch2 = 300
    x2 = jax.random.normal(kx2, (batch2, obs_dim), jnp.float32)
    out2 = jax.block_until_ready(hjb_critic_forward(x2, params, tb_max=128))
    ref2 = reference_forward(x2, params)
    assert out2.shape == (batch2,), out2.shape
    assert jnp.allclose(out2, ref2, **TOL), "tiled path mismatch"

    print("KERNEL_OK")
</pallas_src>

<mosaic_0001>
module attributes {stable_mosaic.version = 11 : i64} {
  func.func @hjb_critic_kernel(%arg0: i32, %arg1: memref<16x128xf32, #tpu.memory_space<vmem>>, %arg2: memref<256x16xbf16, #tpu.memory_space<vmem>>, %arg3: memref<256x1xf32, #tpu.memory_space<vmem>>, %arg4: memref<256x256xbf16, #tpu.memory_space<vmem>>, %arg5: memref<256x1xf32, #tpu.memory_space<vmem>>, %arg6: memref<256x1xf32, #tpu.memory_space<vmem>>, %arg7: memref<1x1xf32, #tpu.memory_space<vmem>>, %arg8: memref<1x128xf32, #tpu.memory_space<vmem>>) attributes {dimension_semantics = [#tpu.dimension_semantics<parallel>], iteration_bounds = array<i64: 1>, scalar_prefetch = 0 : i64, scratch_operands = 0 : i64, tpu.core_type = #tpu.core_type<tc>, window_params = [{transform_indices = @transform_0, window_bounds = array<i64: 16, 128>}, {pipeline_mode = #tpu.pipeline_mode<synchronous>, transform_indices = @transform_1, window_bounds = array<i64: 256, 16>}, {pipeline_mode = #tpu.pipeline_mode<synchronous>, transform_indices = @transform_2, window_bounds = array<i64: 256, 1>}, {pipeline_mode = #tpu.pipeline_mode<synchronous>, transform_indices = @transform_3, window_bounds = array<i64: 256, 256>}, {pipeline_mode = #tpu.pipeline_mode<synchronous>, transform_indices = @transform_4, window_bounds = array<i64: 256, 1>}, {pipeline_mode = #tpu.pipeline_mode<synchronous>, transform_indices = @transform_5, window_bounds = array<i64: 256, 1>}, {pipeline_mode = #tpu.pipeline_mode<synchronous>, transform_indices = @transform_6, window_bounds = array<i64: 1, 1>}, {transform_indices = @transform_7, window_bounds = array<i64: 1, 128>}]} {
    %c0 = arith.constant 0 : index
    %c0_0 = arith.constant 0 : index
    %0 = vector.load %arg1[%c0, %c0_0] : memref<16x128xf32, #tpu.memory_space<vmem>>, vector<16x128xf32>
    %1 = arith.truncf %0 : vector<16x128xf32> to vector<16x128xbf16>
    %c0_1 = arith.constant 0 : index
    %c0_2 = arith.constant 0 : index
    %2 = vector.load %arg2[%c0_1, %c0_2] : memref<256x16xbf16, #tpu.memory_space<vmem>>, vector<256x16xbf16>
    %cst = arith.constant dense<0.000000e+00> : vector<256x128xf32>
    %3 = tpu.matmul %2, %1, %cst {dimension_numbers = #tpu.dot_dimension_numbers<[1], [0], [0], [1], [0, 0, 1, 1], [], []>} : vector<256x16xbf16>, vector<16x128xbf16>, vector<256x128xf32> -> vector<256x128xf32>
    %c0_3 = arith.constant 0 : index
    %c0_4 = arith.constant 0 : index
    %4 = vector.load %arg3[%c0_3, %c0_4] : memref<256x1xf32, #tpu.memory_space<vmem>>, vector<256x1xf32>
    %5 = vector.broadcast %4 : vector<256x1xf32> to vector<256x128xf32>
    %6 = arith.addf %3, %5 : vector<256x128xf32>
    %cst_5 = arith.constant 0.000000e+00 : f32
    %7 = vector.broadcast %cst_5 : f32 to vector<256x128xf32>
    %8 = arith.subf %7, %6 : vector<256x128xf32>
    %9 = math.exp %8 : vector<256x128xf32>
    %cst_6 = arith.constant 1.000000e+00 : f32
    %10 = vector.broadcast %cst_6 : f32 to vector<256x128xf32>
    %11 = arith.addf %10, %9 : vector<256x128xf32>
    %12 = tpu.reciprocal %11 {approx = true} : vector<256x128xf32> -> vector<256x128xf32>
    %13 = arith.mulf %6, %12 : vector<256x128xf32>
    %c0_7 = arith.constant 0 : index
    %c0_8 = arith.constant 0 : index
    %14 = vector.load %arg4[%c0_7, %c0_8] : memref<256x256xbf16, #tpu.memory_space<vmem>>, vector<256x256xbf16>
    %15 = arith.truncf %13 : vector<256x128xf32> to vector<256x128xbf16>
    %cst_9 = arith.constant dense<0.000000e+00> : vector<256x128xf32>
    %16 = tpu.matmul %14, %15, %cst_9 {dimension_numbers = #tpu.dot_dimension_numbers<[1], [0], [0], [1], [0, 0, 1, 1], [], []>} : vector<256x256xbf16>, vector<256x128xbf16>, vector<256x128xf32> -> vector<256x128xf32>
    %c0_10 = arith.constant 0 : index
    %c0_11 = arith.constant 0 : index
    %17 = vector.load %arg5[%c0_10, %c0_11] : memref<256x1xf32, #tpu.memory_space<vmem>>, vector<256x1xf32>
    %18 = vector.broadcast %17 : vector<256x1xf32> to vector<256x128xf32>
    %19 = arith.addf %16, %18 : vector<256x128xf32>
    %cst_12 = arith.constant 0.000000e+00 : f32
    %20 = vector.broadcast %cst_12 : f32 to vector<256x128xf32>
    %21 = arith.subf %20, %19 : vector<256x128xf32>
    %22 = math.exp %21 : vector<256x128xf32>
    %cst_13 = arith.constant 1.000000e+00 : f32
    %23 = vector.broadcast %cst_13 : f32 to vector<256x128xf32>
    %24 = arith.addf %23, %22 : vector<256x128xf32>
    %25 = tpu.reciprocal %24 {approx = true} : vector<256x128xf32> -> vector<256x128xf32>
    %26 = arith.mulf %19, %25 : vector<256x128xf32>
    %c0_14 = arith.constant 0 : index
    %c0_15 = arith.constant 0 : index
    %27 = vector.load %arg6[%c0_14, %c0_15] : memref<256x1xf32, #tpu.memory_space<vmem>>, vector<256x1xf32>
    %28 = vector.broadcast %27 : vector<256x1xf32> to vector<256x128xf32>
    %29 = arith.mulf %26, %28 : vector<256x128xf32>
    %cst_16 = arith.constant dense<0.000000e+00> : vector<128xf32>
    %30 = vector.multi_reduction <add>, %29, %cst_16 [0] : vector<256x128xf32> to vector<128xf32>
    %31 = vector.shape_cast %30 : vector<128xf32> to vector<1x128xf32>
    %c0_17 = arith.constant 0 : index
    %c0_18 = arith.constant 0 : index
    %32 = vector.load %arg7[%c0_17, %c0_18] : memref<1x1xf32, #tpu.memory_space<vmem>>, vector<1x1xf32>
    %33 = vector.broadcast %32 : vector<1x1xf32> to vector<1x128xf32>
    %34 = arith.addf %31, %33 : vector<1x128xf32>
    %c0_19 = arith.constant 0 : index
    %c0_20 = arith.constant 0 : index
    %35 = vector.load %arg8[%c0_19, %c0_20] : memref<1x128xf32, #tpu.memory_space<vmem>>, vector<1x128xf32>
    tpu.vector_store %arg8[%c0_19, %c0_20], %34 {strides = array<i32>} : memref<1x128xf32, #tpu.memory_space<vmem>>, vector<1x128xf32>,
    return
  }
  func.func @transform_0(%arg0: i32) -> (i32, i32) {
    %c0_i32 = arith.constant 0 : i32
    %c0_i32_0 = arith.constant 0 : i32
    return %c0_i32, %arg0 : i32, i32
  }
  func.func @transform_1(%arg0: i32) -> (i32, i32) {
    %c0_i32 = arith.constant 0 : i32
    %c0_i32_0 = arith.constant 0 : i32
    %c0_i32_1 = arith.constant 0 : i32
    return %c0_i32, %c0_i32_0 : i32, i32
  }
  func.func @transform_2(%arg0: i32) -> (i32, i32) {
    %c0_i32 = arith.constant 0 : i32
    %c0_i32_0 = arith.constant 0 : i32
    %c0_i32_1 = arith.constant 0 : i32
    return %c0_i32, %c0_i32_0 : i32, i32
  }
  func.func @transform_3(%arg0: i32) -> (i32, i32) {
    %c0_i32 = arith.constant 0 : i32
    %c0_i32_0 = arith.constant 0 : i32
    %c0_i32_1 = arith.constant 0 : i32
    return %c0_i32, %c0_i32_0 : i32, i32
  }
  func.func @transform_4(%arg0: i32) -> (i32, i32) {
    %c0_i32 = arith.constant 0 : i32
    %c0_i32_0 = arith.constant 0 : i32
    %c0_i32_1 = arith.constant 0 : i32
    return %c0_i32, %c0_i32_0 : i32, i32
  }
  func.func @transform_5(%arg0: i32) -> (i32, i32) {
    %c0_i32 = arith.constant 0 : i32
    %c0_i32_0 = arith.constant 0 : i32
    %c0_i32_1 = arith.constant 0 : i32
    return %c0_i32, %c0_i32_0 : i32, i32
  }
  func.func @transform_6(%arg0: i32) -> (i32, i32) {
    %c0_i32 = arith.constant 0 : i32
    %c0_i32_0 = arith.constant 0 : i32
    %c0_i32_1 = arith.constant 0 : i32
    return %c0_i32, %c0_i32_0 : i32, i32
  }
  func.func @transform_7(%arg0: i32) -> (i32, i32) {
    %c0_i32 = arith.constant 0 : i32
    %c0_i32_0 = arith.constant 0 : i32
    return %c0_i32, %arg0 : i32, i32
  }
}

</mosaic_0001>

<llo_original>
// kernel: tpu_custom_call.1
$region0: #{tpu_custom_call.1}
  #allocation0 [shape = 'u32[]', space=smem, size = 0x4, offset = 0x4, fixed_abs, tag = 'smem constant byte address 0x4 - core index']
  #allocation1 [shape = 'u32[144,128]{1,0:T(1,128)}', space=vmem, size = 0x12000, scoped, tag = 'internal scratch']
  #allocation2 [shape = 'f32[1,1]{1,0:T(1,128)S(1)}', space=vmem, size = 0x200, scoped, tag = 'scoped memory for tpu_custom_call.1']
  %s0 = inlined_call_operand.vmem [shape: f32[16,128], index: 0, kind: input, shape index: {}]
  %s1 = inlined_call_operand.vmem [shape: bf16[256,16], index: 1, kind: input, shape index: {}]
  %s2 = inlined_call_operand.vmem [shape: f32[256,1], index: 2, kind: input, shape index: {}]
  %s3 = inlined_call_operand.vmem [shape: bf16[256,256], index: 3, kind: input, shape index: {}]
  %s4 = inlined_call_operand.vmem [shape: f32[256,1], index: 4, kind: input, shape index: {}]
  %s5 = inlined_call_operand.vmem [shape: f32[256,1], index: 5, kind: input, shape index: {}]
  %s6 = inlined_call_operand.<no memory space> [shape: f32[1,1], index: 6, kind: input, shape index: {}]
  %s7 = inlined_call_operand.hbm [shape: f32[1,128], index: 7, kind: output, shape index: {}]
  %s8 = sld [smem:[#allocation0]]
  $region38: #{tpu_custom_call.1} parent=0
    _
  %s10 = ssub.s32 1, %s8
  %s11 = scalar_select 0, %s10, %s8
  %v12 = vstv %s6
  %13 = vst [vmem:[#allocation2] sm:$0x1] %v12
  $region1: #{tpu_custom_call.1} parent=0
    #allocation3 [shape = 'u8[512]{0}', space=vmem, size = 0x400, scoped, tag = 'output window, operand 0, single buffered']
    #allocation4 [shape = 's32[1]{0}', space=sflag, size = 0x4, scoped, tag = 'scoped memory for tpu_custom_call.1']
    %14 = vsyncpa [#allocation4], 0
    // Predicated region
    $region2: #{tpu_custom_call.1} parent=1 // pred_check
      _
    $region3: #{tpu_custom_call.1} parent=1 // pred_check_branch
      %16 = sbr.rel (0) target = $region5
    $region4: #{tpu_custom_call.1} parent=1 // pred_region
      _
    $region5: #{tpu_custom_call.1} parent=1 // pred_fallthru
      _
    // Predicated region
    $region6: #{tpu_custom_call.1} parent=1 // pred_check
      _
    $region7: #{tpu_custom_call.1} parent=1 // pred_check_branch
      %18 = sbr.rel (0) target = $region9
    $region8: #{tpu_custom_call.1} parent=1 // pred_region
      _
    $region9: #{tpu_custom_call.1} parent=1 // pred_fallthru
      _
    // Predicated region
    $region10: #{tpu_custom_call.1} parent=1 // pred_check
      _
    $region11: #{tpu_custom_call.1} parent=1 // pred_check_branch
      %20 = sbr.rel (0) target = $region13
    $region12: #{tpu_custom_call.1} parent=1 // pred_region
      _
    $region13: #{tpu_custom_call.1} parent=1 // pred_fallthru
      _
    // Predicated region
    $region14: #{tpu_custom_call.1} parent=1 // pred_check
      _
    $region15: #{tpu_custom_call.1} parent=1 // pred_check_branch
      %22 = sbr.rel (0) target = $region17
    $region16: #{tpu_custom_call.1} parent=1 // pred_region
      _
    $region17: #{tpu_custom_call.1} parent=1 // pred_fallthru
      _
    // Predicated region
    $region18: #{tpu_custom_call.1} parent=1 // pred_check
      _
    $region19: #{tpu_custom_call.1} parent=1 // pred_check_branch
      %24 = sbr.rel (0) target = $region21
    $region20: #{tpu_custom_call.1} parent=1 // pred_region
      _
    $region21: #{tpu_custom_call.1} parent=1 // pred_fallthru
      _
    // Predicated region
    $region22: #{tpu_custom_call.1} parent=1 // pred_check
      _
    $region23: #{tpu_custom_call.1} parent=1 // pred_check_branch
      %26 = sbr.rel (0) target = $region25
    $region24: #{tpu_custom_call.1} parent=1 // pred_region
      _
    $region25: #{tpu_custom_call.1} parent=1 // pred_fallthru
      _
    // Predicated region
    $region26: #{tpu_custom_call.1} parent=1 // pred_check
      _
    $region27: #{tpu_custom_call.1} parent=1 // pred_check_branch
      %28 = sbr.rel (0) target = $region29
    $region28: #{tpu_custom_call.1} parent=1 // pred_region
      _
    $region29: #{tpu_custom_call.1} parent=1 // pred_fallthru
      _
    %v30 = vld [vmem:[%s0] sm:$0xff]
    %v31 = vld [vmem:[%s0 + $0x8] sm:$0xff]
    %v32 = vpack.c.bf16 %v31, %v30
    %v33 = vld [vmem:[%s1] sm:$0xf]
    %v34 = vld [vmem:[%s1 + $0x4] sm:$0xf]
    %v35 = vld [vmem:[%s1 + $0x8] sm:$0xf]
    %v36 = vld [vmem:[%s1 + $0xc] sm:$0xf]
    %v37 = vld [vmem:[%s1 + $0x10] sm:$0xf]
    %v38 = vld [vmem:[%s1 + $0x14] sm:$0xf]
    %v39 = vld [vmem:[%s1 + $0x18] sm:$0xf]
    %v40 = vld [vmem:[%s1 + $0x1c] sm:$0xf]
    %v41 = vld [vmem:[%s1 + $0x20] sm:$0xf]
    %v42 = vld [vmem:[%s1 + $0x24] sm:$0xf]
    %v43 = vld [vmem:[%s1 + $0x28] sm:$0xf]
    %v44 = vld [vmem:[%s1 + $0x2c] sm:$0xf]
    %v45 = vld [vmem:[%s1 + $0x30] sm:$0xf]
    %v46 = vld [vmem:[%s1 + $0x34] sm:$0xf]
    %v47 = vld [vmem:[%s1 + $0x38] sm:$0xf]
    %v48 = vld [vmem:[%s1 + $0x3c] sm:$0xf]
    %v49 = vld [vmem:[%s1 + $0x40] sm:$0xf]
    %v50 = vld [vmem:[%s1 + $0x44] sm:$0xf]
    %v51 = vld [vmem:[%s1 + $0x48] sm:$0xf]
    %v52 = vld [vmem:[%s1 + $0x4c] sm:$0xf]
    %v53 = vld [vmem:[%s1 + $0x50] sm:$0xf]
    %v54 = vld [vmem:[%s1 + $0x54] sm:$0xf]
    %v55 = vld [vmem:[%s1 + $0x58] sm:$0xf]
    %v56 = vld [vmem:[%s1 + $0x5c] sm:$0xf]
    %v57 = vld [vmem:[%s1 + $0x60] sm:$0xf]
    %v58 = vld [vmem:[%s1 + $0x64] sm:$0xf]
    %v59 = vld [vmem:[%s1 + $0x68] sm:$0xf]
    %v60 = vld [vmem:[%s1 + $0x6c] sm:$0xf]
    %v61 = vld [vmem:[%s1 + $0x70] sm:$0xf]
    %v62 = vld [vmem:[%s1 + $0x74] sm:$0xf]
    %v63 = vld [vmem:[%s1 + $0x78] sm:$0xf]
    %v64 = vld [vmem:[%s1 + $0x7c] sm:$0xf]
    %v65 = vld [vmem:[%s2] sm:$0xff]
    %v66 = vld [vmem:[%s2 + $0x8] sm:$0xff]
    %v67 = vld [vmem:[%s2 + $0x10] sm:$0xff]
    %v68 = vld [vmem:[%s2 + $0x18] sm:$0xff]
    %v69 = vld [vmem:[%s2 + $0x20] sm:$0xff]
    %v70 = vld [vmem:[%s2 + $0x28] sm:$0xff]
    %v71 = vld [vmem:[%s2 + $0x30] sm:$0xff]
    %v72 = vld [vmem:[%s2 + $0x38] sm:$0xff]
    %v73 = vld [vmem:[%s2 + $0x40] sm:$0xff]
    %v74 = vld [vmem:[%s2 + $0x48] sm:$0xff]
    %v75 = vld [vmem:[%s2 + $0x50] sm:$0xff]
    %v76 = vld [vmem:[%s2 + $0x58] sm:$0xff]
    %v77 = vld [vmem:[%s2 + $0x60] sm:$0xff]
    %v78 = vld [vmem:[%s2 + $0x68] sm:$0xff]
    %v79 = vld [vmem:[%s2 + $0x70] sm:$0xff]
    %v80 = vld [vmem:[%s2 + $0x78] sm:$0xff]
    %v81 = vld [vmem:[%s2 + $0x80] sm:$0xff]
    %v82 = vld [vmem:[%s2 + $0x88] sm:$0xff]
    %v83 = vld [vmem:[%s2 + $0x90] sm:$0xff]
    %v84 = vld [vmem:[%s2 + $0x98] sm:$0xff]
    %v85 = vld [vmem:[%s2 + $0xa0] sm:$0xff]
    %v86 = vld [vmem:[%s2 + $0xa8] sm:$0xff]
    %v87 = vld [vmem:[%s2 + $0xb0] sm:$0xff]
    %v88 = vld [vmem:[%s2 + $0xb8] sm:$0xff]
    %v89 = vld [vmem:[%s2 + $0xc0] sm:$0xff]
    %v90 = vld [vmem:[%s2 + $0xc8] sm:$0xff]
    %v91 = vld [vmem:[%s2 + $0xd0] sm:$0xff]
    %v92 = vld [vmem:[%s2 + $0xd8] sm:$0xff]
    %v93 = vld [vmem:[%s2 + $0xe0] sm:$0xff]
    %v94 = vld [vmem:[%s2 + $0xe8] sm:$0xff]
    %v95 = vld [vmem:[%s2 + $0xf0] sm:$0xff]
    %v96 = vld [vmem:[%s2 + $0xf8] sm:$0xff]
    %98 = vset.pattern.permute.xlu0 0
    %99 = vperm.xlu0 %98, %v65
    %v100 = vpop.permute.xlu0 %99
    %103 = vset.pattern.permute.xlu0 0
    %104 = vperm.xlu0 %103, %v66
    %v105 = vpop.permute.xlu0 %104
    %108 = vset.pattern.permute.xlu0 0
    %109 = vperm.xlu0 %108, %v67
    %v110 = vpop.permute.xlu0 %109
    %113 = vset.pattern.permute.xlu0 0
    %114 = vperm.xlu0 %113, %v68
    %v115 = vpop.permute.xlu0 %114
    %118 = vset.pattern.permute.xlu0 0
    %119 = vperm.xlu0 %118, %v69
    %v120 = vpop.permute.xlu0 %119
    %123 = vset.pattern.permute.xlu0 0
    %124 = vperm.xlu0 %123, %v70
    %v125 = vpop.permute.xlu0 %124
    %128 = vset.pattern.permute.xlu0 0
    %129 = vperm.xlu0 %128, %v71
    %v130 = vpop.permute.xlu0 %129
    %133 = vset.pattern.permute.xlu0 0
    %134 = vperm.xlu0 %133, %v72
    %v135 = vpop.permute.xlu0 %134
    %138 = vset.pattern.permute.xlu0 0
    %139 = vperm.xlu0 %138, %v73
    %v140 = vpop.permute.xlu0 %139
    %143 = vset.pattern.permute.xlu0 0
    %144 = vperm.xlu0 %143, %v74
    %v145 = vpop.permute.xlu0 %144
    %148 = vset.pattern.permute.xlu0 0
    %149 = vperm.xlu0 %148, %v75
    %v150 = vpop.permute.xlu0 %149
    %153 = vset.pattern.permute.xlu0 0
    %154 = vperm.xlu0 %153, %v76
    %v155 = vpop.permute.xlu0 %154
    %158 = vset.pattern.permute.xlu0 0
    %159 = vperm.xlu0 %158, %v77
    %v160 = vpop.permute.xlu0 %159
    %163 = vset.pattern.permute.xlu0 0
    %164 = vperm.xlu0 %163, %v78
    %v165 = vpop.permute.xlu0 %164
    %168 = vset.pattern.permute.xlu0 0
    %169 = vperm.xlu0 %168, %v79
    %v170 = vpop.permute.xlu0 %169
    %173 = vset.pattern.permute.xlu0 0
    %174 = vperm.xlu0 %173, %v80
    %v175 = vpop.permute.xlu0 %174
    %178 = vset.pattern.permute.xlu0 0
    %179 = vperm.xlu0 %178, %v81
    %v180 = vpop.permute.xlu0 %179
    %183 = vset.pattern.permute.xlu0 0
    %184 = vperm.xlu0 %183, %v82
    %v185 = vpop.permute.xlu0 %184
    %188 = vset.pattern.permute.xlu0 0
    %189 = vperm.xlu0 %188, %v83
    %v190 = vpop.permute.xlu0 %189
    %193 = vset.pattern.permute.xlu0 0
    %194 = vperm.xlu0 %193, %v84
    %v195 = vpop.permute.xlu0 %194
    %198 = vset.pattern.permute.xlu0 0
    %199 = vperm.xlu0 %198, %v85
    %v200 = vpop.permute.xlu0 %199
    %203 = vset.pattern.permute.xlu0 0
    %204 = vperm.xlu0 %203, %v86
    %v205 = vpop.permute.xlu0 %204
    %208 = vset.pattern.permute.xlu0 0
    %209 = vperm.xlu0 %208, %v87
    %v210 = vpop.permute.xlu0 %209
    %213 = vset.pattern.permute.xlu0 0
    %214 = vperm.xlu0 %213, %v88
    %v215 = vpop.permute.xlu0 %214
    %218 = vset.pattern.permute.xlu0 0
    %219 = vperm.xlu0 %218, %v89
    %v220 = vpop.permute.xlu0 %219
    %223 = vset.pattern.permute.xlu0 0
    %224 = vperm.xlu0 %223, %v90
    %v225 = vpop.permute.xlu0 %224
    %228 = vset.pattern.permute.xlu0 0
    %229 = vperm.xlu0 %228, %v91
    %v230 = vpop.permute.xlu0 %229
    %233 = vset.pattern.permute.xlu0 0
    %234 = vperm.xlu0 %233, %v92
    %v235 = vpop.permute.xlu0 %234
    %238 = vset.pattern.permute.xlu0 0
    %239 = vperm.xlu0 %238, %v93
    %v240 = vpop.permute.xlu0 %239
    %243 = vset.pattern.permute.xlu0 0
    %244 = vperm.xlu0 %243, %v94
    %v245 = vpop.permute.xlu0 %244
    %248 = vset.pattern.permute.xlu0 0
    %249 = vperm.xlu0 %248, %v95
    %v250 = vpop.permute.xlu0 %249
    %253 = vset.pattern.permute.xlu0 0
    %254 = vperm.xlu0 %253, %v96
    %v255 = vpop.permute.xlu0 %254
    %v289 = vunpack.c.l.b16 %v33
    %v290 = vunpack.c.l.b16 %v34
    %v291 = vunpack.c.l.b16 %v35
    %v292 = vunpack.c.l.b16 %v36
    %v293 = vunpack.c.l.b16 %v37
    %v294 = vunpack.c.l.b16 %v38
    %v295 = vunpack.c.l.b16 %v39
    %v296 = vunpack.c.l.b16 %v40
    %v297 = vunpack.c.l.b16 %v41
    %v298 = vunpack.c.l.b16 %v42
    %v299 = vunpack.c.l.b16 %v43
    %v300 = vunpack.c.l.b16 %v44
    %v301 = vunpack.c.l.b16 %v45
    %v302 = vunpack.c.l.b16 %v46
    %v303 = vunpack.c.l.b16 %v47
    %v304 = vunpack.c.l.b16 %v48
    %v305 = vunpack.c.l.b16 %v49
    %v306 = vunpack.c.l.b16 %v50
    %v307 = vunpack.c.l.b16 %v51
    %v308 = vunpack.c.l.b16 %v52
    %v309 = vunpack.c.l.b16 %v53
    %v310 = vunpack.c.l.b16 %v54
    %v311 = vunpack.c.l.b16 %v55
    %v312 = vunpack.c.l.b16 %v56
    %v313 = vunpack.c.l.b16 %v57
    %v314 = vunpack.c.l.b16 %v58
    %v315 = vunpack.c.l.b16 %v59
    %v316 = vunpack.c.l.b16 %v60
    %v317 = vunpack.c.l.b16 %v61
    %v318 = vunpack.c.l.b16 %v62
    %v319 = vunpack.c.l.b16 %v63
    %v320 = vunpack.c.l.b16 %v64
    %v321 = vpack.c.b16 %v290, %v289
    %v322 = vpack.c.b16 %v292, %v291
    %v323 = vpack.c.b16 %v294, %v293
    %v324 = vpack.c.b16 %v296, %v295
    %v325 = vpack.c.b16 %v298, %v297
    %v326 = vpack.c.b16 %v300, %v299
    %v327 = vpack.c.b16 %v302, %v301
    %v328 = vpack.c.b16 %v304, %v303
    %v329 = vpack.c.b16 %v306, %v305
    %v330 = vpack.c.b16 %v308, %v307
    %v331 = vpack.c.b16 %v310, %v309
    %v332 = vpack.c.b16 %v312, %v311
    %v333 = vpack.c.b16 %v314, %v313
    %v334 = vpack.c.b16 %v316, %v315
    %v335 = vpack.c.b16 %v318, %v317
    %v336 = vpack.c.b16 %v320, %v319
    %vm337 = vcmask 130048
    %v339 = vsel %vm337, %v321, 0
    %v342 = vsel %vm337, %v322, 0
    %v345 = vsel %vm337, %v323, 0
    %v348 = vsel %vm337, %v324, 0
    %v351 = vsel %vm337, %v325, 0
    %v354 = vsel %vm337, %v326, 0
    %v357 = vsel %vm337, %v327, 0
    %v360 = vsel %vm337, %v328, 0
    %v363 = vsel %vm337, %v329, 0
    %v366 = vsel %vm337, %v330, 0
    %v369 = vsel %vm337, %v331, 0
    %v372 = vsel %vm337, %v332, 0
    %v375 = vsel %vm337, %v333, 0
    %v378 = vsel %vm337, %v334, 0
    %v381 = vsel %vm337, %v335, 0
    %v384 = vsel %vm337, %v336, 0
    %386 = vmatprep.subr.bf16.mxu0 0
    %387 = vmatpush1.bf16.msra.mxu0 %v32
    %388 = vmatprep.subr.bf16.mxu0 0
    %389 = vmatpush1.bf16.msra.mxu0 0
    %390 = vmatprep.subr.bf16.mxu0 0
    %391 = vmatpush1.bf16.msra.mxu0 0
    %392 = vmatprep.subr.bf16.mxu0 0
    %393 = vmatpush1.bf16.msra.mxu0 0
    %394 = vmatprep.subr.bf16.mxu0 0
    %395 = vmatpush1.bf16.msra.mxu0 0
    %396 = vmatprep.subr.bf16.mxu0 0
    %397 = vmatpush1.bf16.msra.mxu0 0
    %398 = vmatprep.subr.bf16.mxu0 0
    %399 = vmatpush1.bf16.msra.mxu0 0
    %400 = vmatprep.subr.bf16.mxu0 0
    %401 = vmatpush1.bf16.msra.mxu0 0
    %402 = vmatprep.subr.bf16.mxu0 0
    %403 = vmatpush1.bf16.msra.mxu0 0
    %404 = vmatprep.subr.bf16.mxu0 0
    %405 = vmatpush1.bf16.msra.mxu0 0
    %406 = vmatprep.subr.bf16.mxu0 0
    %407 = vmatpush1.bf16.msra.mxu0 0
    %408 = vmatprep.subr.bf16.mxu0 0
    %409 = vmatpush1.bf16.msra.mxu0 0
    %410 = vmatprep.subr.bf16.mxu0 0
    %411 = vmatpush1.bf16.msra.mxu0 0
    %412 = vmatprep.subr.bf16.mxu0 0
    %413 = vmatpush1.bf16.msra.mxu0 0
    %414 = vmatprep.subr.bf16.mxu0 0
    %415 = vmatpush1.bf16.msra.mxu0 0
    %416 = vmatprep.subr.bf16.mxu0 0
    %417 = vmatpush1.bf16.msra.mxu0 0
    %418 = vmatprep.mubr.bf16.mxu0 0
    %419 = vmatmul.mubr.bf16.gmra.mrb[0].mxu0 %v339
    %v420 = vpop.f32.mrb[0].mxu0
    %v421 = vadd.f32 %v100, %v420
    %v422 = vpop.f32.mrb[0].mxu0
    %v423 = vpop.f32.mrb[0].mxu0
    %v424 = vadd.f32 %v105, %v423
    %v425 = vpop.f32.mrb[0].mxu0
    %426 = vmatprep.mubr.bf16.mxu0 0
    %427 = vmatmul.mubr.bf16.gmra.mrb[0].mxu0 %v342
    %v428 = vpop.f32.mrb[0].mxu0
    %v429 = vadd.f32 %v110, %v428
    %v430 = vpop.f32.mrb[0].mxu0
    %v431 = vpop.f32.mrb[0].mxu0
    %v432 = vadd.f32 %v115, %v431
    %v433 = vpop.f32.mrb[0].mxu0
    %434 = vmatprep.mubr.bf16.mxu0 0
    %435 = vmatmul.mubr.bf16.gmra.mrb[0].mxu0 %v345
    %v436 = vpop.f32.mrb[0].mxu0
    %v437 = vadd.f32 %v120, %v436
    %v438 = vpop.f32.mrb[0].mxu0
    %v439 = vpop.f32.mrb[0].mxu0
    %v440 = vadd.f32 %v125, %v439
    %v441 = vpop.f32.mrb[0].mxu0
    %442 = vmatprep.mubr.bf16.mxu0 0
    %443 = vmatmul.mubr.bf16.gmra.mrb[0].mxu0 %v348
    %v444 = vpop.f32.mrb[0].mxu0
    %v445 = vadd.f32 %v130, %v444
    %v446 = vpop.f32.mrb[0].mxu0
    %v447 = vpop.f32.mrb[0].mxu0
    %v448 = vadd.f32 %v135, %v447
    %v449 = vpop.f32.mrb[0].mxu0
    %450 = vmatprep.mubr.bf16.mxu0 0
    %451 = vmatmul.mubr.bf16.gmra.mrb[0].mxu0 %v351
    %v452 = vpop.f32.mrb[0].mxu0
    %v453 = vadd.f32 %v140, %v452
    %v454 = vpop.f32.mrb[0].mxu0
    %v455 = vpop.f32.mrb[0].mxu0
    %v456 = vadd.f32 %v145, %v455
    %v457 = vpop.f32.mrb[0].mxu0
    %458 = vmatprep.mubr.bf16.mxu0 0
    %459 = vmatmul.mubr.bf16.gmra.mrb[0].mxu0 %v354
    %v460 = vpop.f32.mrb[0].mxu0
    %v461 = vadd.f32 %v150, %v460
    %v462 = vpop.f32.mrb[0].mxu0
    %v463 = vpop.f32.mrb[0].mxu0
    %v464 = vadd.f32 %v155, %v463
    %v465 = vpop.f32.mrb[0].mxu0
    %466 = vmatprep.mubr.bf16.mxu0 0
    %467 = vmatmul.mubr.bf16.gmra.mrb[0].mxu0 %v357
    %v468 = vpop.f32.mrb[0].mxu0
    %v469 = vadd.f32 %v160, %v468
    %v470 = vpop.f32.mrb[0].mxu0
    %v471 = vpop.f32.mrb[0].mxu0
    %v472 = vadd.f32 %v165, %v471
    %v473 = vpop.f32.mrb[0].mxu0
    %474 = vmatprep.mubr.bf16.mxu0 0
    %475 = vmatmul.mubr.bf16.gmra.mrb[0].mxu0 %v360
    %v476 = vpop.f32.mrb[0].mxu0
    %v477 = vadd.f32 %v170, %v476
    %v478 = vpop.f32.mrb[0].mxu0
    %v479 = vpop.f32.mrb[0].mxu0
    %v480 = vadd.f32 %v175, %v479
    %v481 = vpop.f32.mrb[0].mxu0
    %482 = vmatprep.mubr.bf16.mxu0 0
    %483 = vmatmul.mubr.bf16.gmra.mrb[0].mxu0 %v363
    %v484 = vpop.f32.mrb[0].mxu0
    %v485 = vadd.f32 %v180, %v484
    %v486 = vpop.f32.mrb[0].mxu0
    %v487 = vpop.f32.mrb[0].mxu0
    %v488 = vadd.f32 %v185, %v487
    %v489 = vpop.f32.mrb[0].mxu0
    %490 = vmatprep.mubr.bf16.mxu0 0
    %491 = vmatmul.mubr.bf16.gmra.mrb[0].mxu0 %v366
    %v492 = vpop.f32.mrb[0].mxu0
    %v493 = vadd.f32 %v190, %v492
    %v494 = vpop.f32.mrb[0].mxu0
    %v495 = vpop.f32.mrb[0].mxu0
    %v496 = vadd.f32 %v195, %v495
    %v497 = vpop.f32.mrb[0].mxu0
    %498 = vmatprep.mubr.bf16.mxu0 0
    %499 = vmatmul.mubr.bf16.gmra.mrb[0].mxu0 %v369
    %v500 = vpop.f32.mrb[0].mxu0
    %v501 = vadd.f32 %v200, %v500
    %v502 = vpop.f32.mrb[0].mxu0
    %v503 = vpop.f32.mrb[0].mxu0
    %v504 = vadd.f32 %v205, %v503
    %v505 = vpop.f32.mrb[0].mxu0
    %506 = vmatprep.mubr.bf16.mxu0 0
    %507 = vmatmul.mubr.bf16.gmra.mrb[0].mxu0 %v372
    %v508 = vpop.f32.mrb[0].mxu0
    %v509 = vadd.f32 %v210, %v508
    %v510 = vpop.f32.mrb[0].mxu0
    %v511 = vpop.f32.mrb[0].mxu0
    %v512 = vadd.f32 %v215, %v511
    %v513 = vpop.f32.mrb[0].mxu0
    %514 = vmatprep.mubr.bf16.mxu0 0
    %515 = vmatmul.mubr.bf16.gmra.mrb[0].mxu0 %v375
    %v516 = vpop.f32.mrb[0].mxu0
    %v517 = vadd.f32 %v220, %v516
    %v518 = vpop.f32.mrb[0].mxu0
    %v519 = vpop.f32.mrb[0].mxu0
    %v520 = vadd.f32 %v225, %v519
    %v521 = vpop.f32.mrb[0].mxu0
    %522 = vmatprep.mubr.bf16.mxu0 0
    %523 = vmatmul.mubr.bf16.gmra.mrb[0].mxu0 %v378
    %v524 = vpop.f32.mrb[0].mxu0
    %v525 = vadd.f32 %v230, %v524
    %v526 = vpop.f32.mrb[0].mxu0
    %v527 = vpop.f32.mrb[0].mxu0
    %v528 = vadd.f32 %v235, %v527
    %v529 = vpop.f32.mrb[0].mxu0
    %530 = vmatprep.mubr.bf16.mxu0 0
    %531 = vmatmul.mubr.bf16.gmra.mrb[0].mxu0 %v381
    %v532 = vpop.f32.mrb[0].mxu0
    %v533 = vadd.f32 %v240, %v532
    %v534 = vpop.f32.mrb[0].mxu0
    %v535 = vpop.f32.mrb[0].mxu0
    %v536 = vadd.f32 %v245, %v535
    %v537 = vpop.f32.mrb[0].mxu0
    %538 = vmatprep.mubr.bf16.mxu0 0
    %539 = vmatmul.mubr.bf16.gmra.mrb[0].mxu0 %v384
    %v540 = vpop.f32.mrb[0].mxu0
    %v541 = vadd.f32 %v250, %v540
    %v542 = vpop.f32.mrb[0].mxu0
    %v543 = vpop.f32.mrb[0].mxu0
    %v544 = vadd.f32 %v255, %v543
    %v545 = vpop.f32.mrb[0].mxu0
    %546 = vdwg.mxu0
    %v547 = vsub.f32 0.0, %v421
    %v548 = vsub.f32 0.0, %v424
    %v549 = vsub.f32 0.0, %v429
    %v550 = vsub.f32 0.0, %v432
    %v551 = vsub.f32 0.0, %v437
    %v552 = vsub.f32 0.0, %v440
    %v553 = vsub.f32 0.0, %v445
    %v554 = vsub.f32 0.0, %v448
    %v555 = vsub.f32 0.0, %v453
    %v556 = vsub.f32 0.0, %v456
    %v557 = vsub.f32 0.0, %v461
    %v558 = vsub.f32 0.0, %v464
    %v559 = vsub.f32 0.0, %v469
    %v560 = vsub.f32 0.0, %v472
    %v561 = vsub.f32 0.0, %v477
    %v562 = vsub.f32 0.0, %v480
    %v563 = vsub.f32 0.0, %v485
    %v564 = vsub.f32 0.0, %v488
    %v565 = vsub.f32 0.0, %v493
    %v566 = vsub.f32 0.0, %v496
    %v567 = vsub.f32 0.0, %v501
    %v568 = vsub.f32 0.0, %v504
    %v569 = vsub.f32 0.0, %v509
    %v570 = vsub.f32 0.0, %v512
    %v571 = vsub.f32 0.0, %v517
    %v572 = vsub.f32 0.0, %v520
    %v573 = vsub.f32 0.0, %v525
    %v574 = vsub.f32 0.0, %v528
    %v575 = vsub.f32 0.0, %v533
    %v576 = vsub.f32 0.0, %v536
    %v577 = vsub.f32 0.0, %v541
    %v578 = vsub.f32 0.0, %v544
    %v579 = vmul.f32 %v547, 1.442695
    %v580 = vpow.pop %v579
    %v581 = vmul.f32 %v548, 1.442695
    %v582 = vpow.pop %v581
    %v583 = vmul.f32 %v549, 1.442695
    %v584 = vpow.pop %v583
    %v585 = vmul.f32 %v550, 1.442695
    %v586 = vpow.pop %v585
    %v587 = vmul.f32 %v551, 1.442695
    %v588 = vpow.pop %v587
    %v589 = vmul.f32 %v552, 1.442695
    %v590 = vpow.pop %v589
    %v591 = vmul.f32 %v553, 1.442695
    %v592 = vpow.pop %v591
    %v593 = vmul.f32 %v554, 1.442695
    %v594 = vpow.pop %v593
    %v595 = vmul.f32 %v555, 1.442695
    %v596 = vpow.pop %v595
    %v597 = vmul.f32 %v556, 1.442695
    %v598 = vpow.pop %v597
    %v599 = vmul.f32 %v557, 1.442695
    %v600 = vpow.pop %v599
    %v601 = vmul.f32 %v558, 1.442695
    %v602 = vpow.pop %v601
    %v603 = vmul.f32 %v559, 1.442695
    %v604 = vpow.pop %v603
    %v605 = vmul.f32 %v560, 1.442695
    %v606 = vpow.pop %v605
    %v607 = vmul.f32 %v561, 1.442695
    %v608 = vpow.pop %v607
    %v609 = vmul.f32 %v562, 1.442695
    %v610 = vpow.pop %v609
    %v611 = vmul.f32 %v563, 1.442695
    %v612 = vpow.pop %v611
    %v613 = vmul.f32 %v564, 1.442695
    %v614 = vpow.pop %v613
    %v615 = vmul.f32 %v565, 1.442695
    %v616 = vpow.pop %v615
    %v617 = vmul.f32 %v566, 1.442695
    %v618 = vpow.pop %v617
    %v619 = vmul.f32 %v567, 1.442695
    %v620 = vpow.pop %v619
    %v621 = vmul.f32 %v568, 1.442695
    %v622 = vpow.pop %v621
    %v623 = vmul.f32 %v569, 1.442695
    %v624 = vpow.pop %v623
    %v625 = vmul.f32 %v570, 1.442695
    %v626 = vpow.pop %v625
    %v627 = vmul.f32 %v571, 1.442695
    %v628 = vpow.pop %v627
    %v629 = vmul.f32 %v572, 1.442695
    %v630 = vpow.pop %v629
    %v631 = vmul.f32 %v573, 1.442695
    %v632 = vpow.pop %v631
    %v633 = vmul.f32 %v574, 1.442695
    %v634 = vpow.pop %v633
    %v635 = vmul.f32 %v575, 1.442695
    %v636 = vpow.pop %v635
    %v637 = vmul.f32 %v576, 1.442695
    %v638 = vpow.pop %v637
    %v639 = vmul.f32 %v577, 1.442695
    %v640 = vpow.pop %v639
    %v641 = vmul.f32 %v578, 1.442695
    %v642 = vpow.pop %v641
    %v643 = vadd.f32 %v580, 1.0
    %v644 = vadd.f32 %v582, 1.0
    %v645 = vadd.f32 %v584, 1.0
    %v646 = vadd.f32 %v586, 1.0
    %v647 = vadd.f32 %v588, 1.0
    %v648 = vadd.f32 %v590, 1.0
    %v649 = vadd.f32 %v592, 1.0
    %v650 = vadd.f32 %v594, 1.0
    %v651 = vadd.f32 %v596, 1.0
    %v652 = vadd.f32 %v598, 1.0
    %v653 = vadd.f32 %v600, 1.0
    %v654 = vadd.f32 %v602, 1.0
    %v655 = vadd.f32 %v604, 1.0
    %v656 = vadd.f32 %v606, 1.0
    %v657 = vadd.f32 %v608, 1.0
    %v658 = vadd.f32 %v610, 1.0
    %v659 = vadd.f32 %v612, 1.0
    %v660 = vadd.f32 %v614, 1.0
    %v661 = vadd.f32 %v616, 1.0
    %v662 = vadd.f32 %v618, 1.0
    %v663 = vadd.f32 %v620, 1.0
    %v664 = vadd.f32 %v622, 1.0
    %v665 = vadd.f32 %v624, 1.0
    %v666 = vadd.f32 %v626, 1.0
    %v667 = vadd.f32 %v628, 1.0
    %v668 = vadd.f32 %v630, 1.0
    %v669 = vadd.f32 %v632, 1.0
    %v670 = vadd.f32 %v634, 1.0
    %v671 = vadd.f32 %v636, 1.0
    %v672 = vadd.f32 %v638, 1.0
    %v673 = vadd.f32 %v640, 1.0
    %v674 = vadd.f32 %v642, 1.0
    %v675 = vrcp.pop %v643
    %v676 = vrcp.pop %v644
    %v677 = vrcp.pop %v645
    %v678 = vrcp.pop %v646
    %v679 = vrcp.pop %v647
    %v680 = vrcp.pop %v648
    %v681 = vrcp.pop %v649
    %v682 = vrcp.pop %v650
    %v683 = vrcp.pop %v651
    %v684 = vrcp.pop %v652
    %v685 = vrcp.pop %v653
    %v686 = vrcp.pop %v654
    %v687 = vrcp.pop %v655
    %v688 = vrcp.pop %v656
    %v689 = vrcp.pop %v657
    %v690 = vrcp.pop %v658
    %v691 = vrcp.pop %v659
    %v692 = vrcp.pop %v660
    %v693 = vrcp.pop %v661
    %v694 = vrcp.pop %v662
    %v695 = vrcp.pop %v663
    %v696 = vrcp.pop %v664
    %v697 = vrcp.pop %v665
    %v698 = vrcp.pop %v666
    %v699 = vrcp.pop %v667
    %v700 = vrcp.pop %v668
    %v701 = vrcp.pop %v669
    %v702 = vrcp.pop %v670
    %v703 = vrcp.pop %v671
    %v704 = vrcp.pop %v672
    %v705 = vrcp.pop %v673
    %v706 = vrcp.pop %v674
    %v707 = vmul.f32 %v421, %v675
    %v708 = vmul.f32 %v424, %v676
    %v709 = vmul.f32 %v429, %v677
    %v710 = vmul.f32 %v432, %v678
    %v711 = vmul.f32 %v437, %v679
    %v712 = vmul.f32 %v440, %v680
    %v713 = vmul.f32 %v445, %v681
    %v714 = vmul.f32 %v448, %v682
    %v715 = vmul.f32 %v453, %v683
    %v716 = vmul.f32 %v456, %v684
    %v717 = vmul.f32 %v461, %v685
    %v718 = vmul.f32 %v464, %v686
    %v719 = vmul.f32 %v469, %v687
    %v720 = vmul.f32 %v472, %v688
    %v721 = vmul.f32 %v477, %v689
    %v722 = vmul.f32 %v480, %v690
    %v723 = vmul.f32 %v485, %v691
    %v724 = vmul.f32 %v488, %v692
    %v725 = vmul.f32 %v493, %v693
    %v726 = vmul.f32 %v496, %v694
    %v727 = vmul.f32 %v501, %v695
    %v728 = vmul.f32 %v504, %v696
    %v729 = vmul.f32 %v509, %v697
    %v730 = vmul.f32 %v512, %v698
    %v731 = vmul.f32 %v517, %v699
    %v732 = vmul.f32 %v520, %v700
    %v733 = vmul.f32 %v525, %v701
    %v734 = vmul.f32 %v528, %v702
    %v735 = vmul.f32 %v533, %v703
    %v736 = vmul.f32 %v536, %v704
    %v737 = vmul.f32 %v541, %v705
    %v738 = vmul.f32 %v544, %v706
    %v739 = vld [vmem:[%s3] sm:$0xff]
    %v740 = vld [vmem:[%s3 + $0x8] sm:$0xff]
    %v741 = vld [vmem:[%s3 + $0x10] sm:$0xff]
    %v742 = vld [vmem:[%s3 + $0x18] sm:$0xff]
    %v743 = vld [vmem:[%s3 + $0x20] sm:$0xff]
    %v744 = vld [vmem:[%s3 + $0x28] sm:$0xff]
    %v745 = vld [vmem:[%s3 + $0x30] sm:$0xff]
    %v746 = vld [vmem:[%s3 + $0x38] sm:$0xff]
    %v747 = vld [vmem:[%s3 + $0x40] sm:$0xff]
    %v748 = vld [vmem:[%s3 + $0x48] sm:$0xff]
    %v749 = vld [vmem:[%s3 + $0x50] sm:$0xff]
    %v750 = vld [vmem:[%s3 + $0x58] sm:$0xff]
    %v751 = vld [vmem:[%s3 + $0x60] sm:$0xff]
    %v752 = vld [vmem:[%s3 + $0x68] sm:$0xff]
    %v753 = vld [vmem:[%s3 + $0x70] sm:$0xff]
    %v754 = vld [vmem:[%s3 + $0x78] sm:$0xff]
    %v755 = vld [vmem:[%s3 + $0x80] sm:$0xff]
    %v756 = vld [vmem:[%s3 + $0x88] sm:$0xff]
    %v757 = vld [vmem:[%s3 + $0x90] sm:$0xff]
    %v758 = vld [vmem:[%s3 + $0x98] sm:$0xff]
    %v759 = vld [vmem:[%s3 + $0xa0] sm:$0xff]
    %v760 = vld [vmem:[%s3 + $0xa8] sm:$0xff]
    %v761 = vld [vmem:[%s3 + $0xb0] sm:$0xff]
    %v762 = vld [vmem:[%s3 + $0xb8] sm:$0xff]
    %v763 = vld [vmem:[%s3 + $0xc0] sm:$0xff]
    %v764 = vld [vmem:[%s3 + $0xc8] sm:$0xff]
    %v765 = vld [vmem:[%s3 + $0xd0] sm:$0xff]
    %v766 = vld [vmem:[%s3 + $0xd8] sm:$0xff]
    %v767 = vld [vmem:[%s3 + $0xe0] sm:$0xff]
    %v768 = vld [vmem:[%s3 + $0xe8] sm:$0xff]
    %v769 = vld [vmem:[%s3 + $0xf0] sm:$0xff]
    %v770 = vld [vmem:[%s3 + $0xf8] sm:$0xff]
    %v771 = vpack.c.bf16 %v708, %v707
    %v772 = vpack.c.bf16 %v710, %v709
    %v773 = vpack.c.bf16 %v712, %v711
    %v774 = vpack.c.bf16 %v714, %v713
    %v775 = vpack.c.bf16 %v716, %v715
    %v776 = vpack.c.bf16 %v718, %v717
    %v777 = vpack.c.bf16 %v720, %v719
    %v778 = vpack.c.bf16 %v722, %v721
    %v779 = vpack.c.bf16 %v724, %v723
    %v780 = vpack.c.bf16 %v726, %v725
    %v781 = vpack.c.bf16 %v728, %v727
    %v782 = vpack.c.bf16 %v730, %v729
    %v783 = vpack.c.bf16 %v732, %v731
    %v784 = vpack.c.bf16 %v734, %v733
    %v785 = vpack.c.bf16 %v736, %v735
    %v786 = vpack.c.bf16 %v738, %v737
    %v787 = vld [vmem:[%s4] sm:$0xff]
    %v788 = vld [vmem:[%s4 + $0x8] sm:$0xff]
    %v789 = vld [vmem:[%s4 + $0x10] sm:$0xff]
    %v790 = vld [vmem:[%s4 + $0x18] sm:$0xff]
    %v791 = vld [vmem:[%s4 + $0x20] sm:$0xff]
    %v792 = vld [vmem:[%s4 + $0x28] sm:$0xff]
    %v793 = vld [vmem:[%s4 + $0x30] sm:$0xff]
    %v794 = vld [vmem:[%s4 + $0x38] sm:$0xff]
    %v795 = vld [vmem:[%s4 + $0x40] sm:$0xff]
    %v796 = vld [vmem:[%s4 + $0x48] sm:$0xff]
    %v797 = vld [vmem:[%s4 + $0x50] sm:$0xff]
    %v798 = vld [vmem:[%s4 + $0x58] sm:$0xff]
    %v799 = vld [vmem:[%s4 + $0x60] sm:$0xff]
    %v800 = vld [vmem:[%s4 + $0x68] sm:$0xff]
    %v801 = vld [vmem:[%s4 + $0x70] sm:$0xff]
    %v802 = vld [vmem:[%s4 + $0x78] sm:$0xff]
    %v803 = vld [vmem:[%s4 + $0x80] sm:$0xff]
    %v804 = vld [vmem:[%s4 + $0x88] sm:$0xff]
    %v805 = vld [vmem:[%s4 + $0x90] sm:$0xff]
    %v806 = vld [vmem:[%s4 + $0x98] sm:$0xff]
    %v807 = vld [vmem:[%s4 + $0xa0] sm:$0xff]
    %v808 = vld [vmem:[%s4 + $0xa8] sm:$0xff]
    %v809 = vld [vmem:[%s4 + $0xb0] sm:$0xff]
    %v810 = vld [vmem:[%s4 + $0xb8] sm:$0xff]
    %v811 = vld [vmem:[%s4 + $0xc0] sm:$0xff]
    %v812 = vld [vmem:[%s4 + $0xc8] sm:$0xff]
    %v813 = vld [vmem:[%s4 + $0xd0] sm:$0xff]
    %v814 = vld [vmem:[%s4 + $0xd8] sm:$0xff]
    %v815 = vld [vmem:[%s4 + $0xe0] sm:$0xff]
    %v816 = vld [vmem:[%s4 + $0xe8] sm:$0xff]
    %v817 = vld [vmem:[%s4 + $0xf0] sm:$0xff]
    %v818 = vld [vmem:[%s4 + $0xf8] sm:$0xff]
    %820 = vset.pattern.permute.xlu0 0
    %821 = vperm.xlu0 %820, %v787
    %v822 = vpop.permute.xlu0 %821
    %825 = vset.pattern.permute.xlu0 0
    %826 = vperm.xlu0 %825, %v788
    %v827 = vpop.permute.xlu0 %826
    %830 = vset.pattern.permute.xlu0 0
    %831 = vperm.xlu0 %830, %v789
    %v832 = vpop.permute.xlu0 %831
    %835 = vset.pattern.permute.xlu0 0
    %836 = vperm.xlu0 %835, %v790
    %v837 = vpop.permute.xlu0 %836
    %840 = vset.pattern.permute.xlu0 0
    %841 = vperm.xlu0 %840, %v791
    %v842 = vpop.permute.xlu0 %841
    %845 = vset.pattern.permute.xlu0 0
    %846 = vperm.xlu0 %845, %v792
    %v847 = vpop.permute.xlu0 %846
    %850 = vset.pattern.permute.xlu0 0
    %851 = vperm.xlu0 %850, %v793
    %v852 = vpop.permute.xlu0 %851
    %855 = vset.pattern.permute.xlu0 0
    %856 = vperm.xlu0 %855, %v794
    %v857 = vpop.permute.xlu0 %856
    %860 = vset.pattern.permute.xlu0 0
    %861 = vperm.xlu0 %860, %v795
    %v862 = vpop.permute.xlu0 %861
    %865 = vset.pattern.permute.xlu0 0
    %866 = vperm.xlu0 %865, %v796
    %v867 = vpop.permute.xlu0 %866
    %870 = vset.pattern.permute.xlu0 0
    %871 = vperm.xlu0 %870, %v797
    %v872 = vpop.permute.xlu0 %871
    %875 = vset.pattern.permute.xlu0 0
    %876 = vperm.xlu0 %875, %v798
    %v877 = vpop.permute.xlu0 %876
    %880 = vset.pattern.permute.xlu0 0
    %881 = vperm.xlu0 %880, %v799
    %v882 = vpop.permute.xlu0 %881
    %885 = vset.pattern.permute.xlu0 0
    %886 = vperm.xlu0 %885, %v800
    %v887 = vpop.permute.xlu0 %886
    %890 = vset.pattern.permute.xlu0 0
    %891 = vperm.xlu0 %890, %v801
    %v892 = vpop.permute.xlu0 %891
    %895 = vset.pattern.permute.xlu0 0
    %896 = vperm.xlu0 %895, %v802
    %v897 = vpop.permute.xlu0 %896
    %900 = vset.pattern.permute.xlu0 0
    %901 = vperm.xlu0 %900, %v803
    %v902 = vpop.permute.xlu0 %901
    %905 = vset.pattern.permute.xlu0 0
    %906 = vperm.xlu0 %905, %v804
    %v907 = vpop.permute.xlu0 %906
    %910 = vset.pattern.permute.xlu0 0
    %911 = vperm.xlu0 %910, %v805
    %v912 = vpop.permute.xlu0 %911
    %915 = vset.pattern.permute.xlu0 0
    %916 = vperm.xlu0 %915, %v806
    %v917 = vpop.permute.xlu0 %916
    %920 = vset.pattern.permute.xlu0 0
    %921 = vperm.xlu0 %920, %v807
    %v922 = vpop.permute.xlu0 %921
    %925 = vset.pattern.permute.xlu0 0
    %926 = vperm.xlu0 %925, %v808
    %v927 = vpop.permute.xlu0 %926
    %930 = vset.pattern.permute.xlu0 0
    %931 = vperm.xlu0 %930, %v809
    %v932 = vpop.permute.xlu0 %931
    %935 = vset.pattern.permute.xlu0 0
    %936 = vperm.xlu0 %935, %v810
    %v937 = vpop.permute.xlu0 %936
    %940 = vset.pattern.permute.xlu0 0
    %941 = vperm.xlu0 %940, %v811
    %v942 = vpop.permute.xlu0 %941
    %945 = vset.pattern.permute.xlu0 0
    %946 = vperm.xlu0 %945, %v812
    %v947 = vpop.permute.xlu0 %946
    %950 = vset.pattern.permute.xlu0 0
    %951 = vperm.xlu0 %950, %v813
    %v952 = vpop.permute.xlu0 %951
    %955 = vset.pattern.permute.xlu0 0
    %956 = vperm.xlu0 %955, %v814
    %v957 = vpop.permute.xlu0 %956
    %960 = vset.pattern.permute.xlu0 0
    %961 = vperm.xlu0 %960, %v815
    %v962 = vpop.permute.xlu0 %961
    %965 = vset.pattern.permute.xlu0 0
    %966 = vperm.xlu0 %965, %v816
    %v967 = vpop.permute.xlu0 %966
    %970 = vset.pattern.permute.xlu0 0
    %971 = vperm.xlu0 %970, %v817
    %v972 = vpop.permute.xlu0 %971
    %975 = vset.pattern.permute.xlu0 0
    %976 = vperm.xlu0 %975, %v818
    %v977 = vpop.permute.xlu0 %976
    %v1011 = vunpack.c.l.b16 %v739
    %v1012 = vunpack.c.h.b16 %v739
    %v1013 = vunpack.c.l.b16 %v740
    %v1014 = vunpack.c.h.b16 %v740
    %v1015 = vunpack.c.l.b16 %v741
    %v1016 = vunpack.c.h.b16 %v741
    %v1017 = vunpack.c.l.b16 %v742
    %v1018 = vunpack.c.h.b16 %v742
    %v1019 = vunpack.c.l.b16 %v743
    %v1020 = vunpack.c.h.b16 %v743
    %v1021 = vunpack.c.l.b16 %v744
    %v1022 = vunpack.c.h.b16 %v744
    %v1023 = vunpack.c.l.b16 %v745
    %v1024 = vunpack.c.h.b16 %v745
    %v1025 = vunpack.c.l.b16 %v746
    %v1026 = vunpack.c.h.b16 %v746
    %v1027 = vunpack.c.l.b16 %v747
    %v1028 = vunpack.c.h.b16 %v747
    %v1029 = vunpack.c.l.b16 %v748
    %v1030 = vunpack.c.h.b16 %v748
    %v1031 = vunpack.c.l.b16 %v749
    %v1032 = vunpack.c.h.b16 %v749
    %v1033 = vunpack.c.l.b16 %v750
    %v1034 = vunpack.c.h.b16 %v750
    %v1035 = vunpack.c.l.b16 %v751
    %v1036 = vunpack.c.h.b16 %v751
    %v1037 = vunpack.c.l.b16 %v752
    %v1038 = vunpack.c.h.b16 %v752
    %v1039 = vunpack.c.l.b16 %v753
    %v1040 = vunpack.c.h.b16 %v753
    %v1041 = vunpack.c.l.b16 %v754
    %v1042 = vunpack.c.h.b16 %v754
    %v1043 = vunpack.c.l.b16 %v755
    %v1044 = vunpack.c.h.b16 %v755
    %v1045 = vunpack.c.l.b16 %v756
    %v1046 = vunpack.c.h.b16 %v756
    %v1047 = vunpack.c.l.b16 %v757
    %v1048 = vunpack.c.h.b16 %v757
    %v1049 = vunpack.c.l.b16 %v758
    %v1050 = vunpack.c.h.b16 %v758
    %v1051 = vunpack.c.l.b16 %v759
    %v1052 = vunpack.c.h.b16 %v759
    %v1053 = vunpack.c.l.b16 %v760
    %v1054 = vunpack.c.h.b16 %v760
    %v1055 = vunpack.c.l.b16 %v761
    %v1056 = vunpack.c.h.b16 %v761
    %v1057 = vunpack.c.l.b16 %v762
    %v1058 = vunpack.c.h.b16 %v762
    %v1059 = vunpack.c.l.b16 %v763
    %v1060 = vunpack.c.h.b16 %v763
    %v1061 = vunpack.c.l.b16 %v764
    %v1062 = vunpack.c.h.b16 %v764
    %v1063 = vunpack.c.l.b16 %v765
    %v1064 = vunpack.c.h.b16 %v765
    %v1065 = vunpack.c.l.b16 %v766
    %v1066 = vunpack.c.h.b16 %v766
    %v1067 = vunpack.c.l.b16 %v767
    %v1068 = vunpack.c.h.b16 %v767
    %v1069 = vunpack.c.l.b16 %v768
    %v1070 = vunpack.c.h.b16 %v768
    %v1071 = vunpack.c.l.b16 %v769
    %v1072 = vunpack.c.h.b16 %v769
    %v1073 = vunpack.c.l.b16 %v770
    %v1074 = vunpack.c.h.b16 %v770
    %v1075 = vpack.c.b16 %v1013, %v1011
    %v1076 = vpack.c.b16 %v1014, %v1012
    %v1077 = vpack.c.b16 %v1017, %v1015
    %v1078 = vpack.c.b16 %v1018, %v1016
    %v1079 = vpack.c.b16 %v1021, %v1019
    %v1080 = vpack.c.b16 %v1022, %v1020
    %v1081 = vpack.c.b16 %v1025, %v1023
    %v1082 = vpack.c.b16 %v1026, %v1024
    %v1083 = vpack.c.b16 %v1029, %v1027
    %v1084 = vpack.c.b16 %v1030, %v1028
    %v1085 = vpack.c.b16 %v1033, %v1031
    %v1086 = vpack.c.b16 %v1034, %v1032
    %v1087 = vpack.c.b16 %v1037, %v1035
    %v1088 = vpack.c.b16 %v1038, %v1036
    %v1089 = vpack.c.b16 %v1041, %v1039
    %v1090 = vpack.c.b16 %v1042, %v1040
    %v1091 = vpack.c.b16 %v1045, %v1043
    %v1092 = vpack.c.b16 %v1046, %v1044
    %v1093 = vpack.c.b16 %v1049, %v1047
    %v1094 = vpack.c.b16 %v1050, %v1048
    %v1095 = vpack.c.b16 %v1053, %v1051
    %v1096 = vpack.c.b16 %v1054, %v1052
    %v1097 = vpack.c.b16 %v1057, %v1055
    %v1098 = vpack.c.b16 %v1058, %v1056
    %v1099 = vpack.c.b16 %v1061, %v1059
    %v1100 = vpack.c.b16 %v1062, %v1060
    %v1101 = vpack.c.b16 %v1065, %v1063
    %v1102 = vpack.c.b16 %v1066, %v1064
    %v1103 = vpack.c.b16 %v1069, %v1067
    %v1104 = vpack.c.b16 %v1070, %v1068
    %v1105 = vpack.c.b16 %v1073, %v1071
    %v1106 = vpack.c.b16 %v1074, %v1072
    %1139 = vmatprep.subr.bf16.mxu0 0
    %1140 = vmatpush1.bf16.msra.mxu0 %v771
    %1141 = vmatprep.subr.bf16.mxu0 0
    %1142 = vmatpush1.bf16.msra.mxu0 %v772
    %1143 = vmatprep.subr.bf16.mxu0 0
    %1144 = vmatpush1.bf16.msra.mxu0 %v773
    %1145 = vmatprep.subr.bf16.mxu0 0
    %1146 = vmatpush1.bf16.msra.mxu0 %v774
    %1147 = vmatprep.subr.bf16.mxu0 0
    %1148 = vmatpush1.bf16.msra.mxu0 %v775
    %1149 = vmatprep.subr.bf16.mxu0 0
    %1150 = vmatpush1.bf16.msra.mxu0 %v776
    %1151 = vmatprep.subr.bf16.mxu0 0
    %1152 = vmatpush1.bf16.msra.mxu0 %v777
    %1153 = vmatprep.subr.bf16.mxu0 0
    %1154 = vmatpush1.bf16.msra.mxu0 %v778
    %1155 = vmatprep.subr.bf16.mxu0 0
    %1156 = vmatpush1.bf16.msra.mxu0 %v779
    %1157 = vmatprep.subr.bf16.mxu0 0
    %1158 = vmatpush1.bf16.msra.mxu0 %v780
    %1159 = vmatprep.subr.bf16.mxu0 0
    %1160 = vmatpush1.bf16.msra.mxu0 %v781
    %1161 = vmatprep.subr.bf16.mxu0 0
    %1162 = vmatpush1.bf16.msra.mxu0 %v782
    %1163 = vmatprep.subr.bf16.mxu0 0
    %1164 = vmatpush1.bf16.msra.mxu0 %v783
    %1165 = vmatprep.subr.bf16.mxu0 0
    %1166 = vmatpush1.bf16.msra.mxu0 %v784
    %1167 = vmatprep.subr.bf16.mxu0 0
    %1168 = vmatpush1.bf16.msra.mxu0 %v785
    %1169 = vmatprep.subr.bf16.mxu0 0
    %1170 = vmatpush1.bf16.msra.mxu0 %v786
    %1171 = vmatprep.mubr.bf16.mxu0 %v1076
    %1172 = vmatmul.mubr.bf16.gmra.mrb[0].mxu0 %v1075
    %v1173 = vpop.f32.mrb[0].mxu0
    %v1174 = vadd.f32 %v822, %v1173
    %v1175 = vpop.f32.mrb[0].mxu0
    %v1176 = vpop.f32.mrb[0].mxu0
    %v1177 = vadd.f32 %v827, %v1176
    %v1178 = vpop.f32.mrb[0].mxu0
    %1179 = vmatprep.mubr.bf16.mxu0 %v1078
    %1180 = vmatmul.mubr.bf16.gmra.mrb[0].mxu0 %v1077
    %v1181 = vpop.f32.mrb[0].mxu0
    %v1182 = vadd.f32 %v832, %v1181
    %v1183 = vpop.f32.mrb[0].mxu0
    %v1184 = vpop.f32.mrb[0].mxu0
    %v1185 = vadd.f32 %v837, %v1184
    %v1186 = vpop.f32.mrb[0].mxu0
    %1187 = vmatprep.mubr.bf16.mxu0 %v1080
    %1188 = vmatmul.mubr.bf16.gmra.mrb[0].mxu0 %v1079
    %v1189 = vpop.f32.mrb[0].mxu0
    %v1190 = vadd.f32 %v842, %v1189
    %v1191 = vpop.f32.mrb[0].mxu0
    %v1192 = vpop.f32.mrb[0].mxu0
    %v1193 = vadd.f32 %v847, %v1192
    %v1194 = vpop.f32.mrb[0].mxu0
    %1195 = vmatprep.mubr.bf16.mxu0 %v1082
    %1196 = vmatmul.mubr.bf16.gmra.mrb[0].mxu0 %v1081
    %v1197 = vpop.f32.mrb[0].mxu0
    %v1198 = vadd.f32 %v852, %v1197
    %v1199 = vpop.f32.mrb[0].mxu0
    %v1200 = vpop.f32.mrb[0].mxu0
    %v1201 = vadd.f32 %v857, %v1200
    %v1202 = vpop.f32.mrb[0].mxu0
    %1203 = vmatprep.mubr.bf16.mxu0 %v1084
    %1204 = vmatmul.mubr.bf16.gmra.mrb[0].mxu0 %v1083
    %v1205 = vpop.f32.mrb[0].mxu0
    %v1206 = vadd.f32 %v862, %v1205
    %v1207 = vpop.f32.mrb[0].mxu0
    %v1208 = vpop.f32.mrb[0].mxu0
    %v1209 = vadd.f32 %v867, %v1208
    %v1210 = vpop.f32.mrb[0].mxu0
    %1211 = vmatprep.mubr.bf16.mxu0 %v1086
    %1212 = vmatmul.mubr.bf16.gmra.mrb[0].mxu0 %v1085
    %v1213 = vpop.f32.mrb[0].mxu0
    %v1214 = vadd.f32 %v872, %v1213
    %v1215 = vpop.f32.mrb[0].mxu0
    %v1216 = vpop.f32.mrb[0].mxu0
    %v1217 = vadd.f32 %v877, %v1216
    %v1218 = vpop.f32.mrb[0].mxu0
    %1219 = vmatprep.mubr.bf16.mxu0 %v1088
    %1220 = vmatmul.mubr.bf16.gmra.mrb[0].mxu0 %v1087
    %v1221 = vpop.f32.mrb[0].mxu0
    %v1222 = vadd.f32 %v882, %v1221
    %v1223 = vpop.f32.mrb[0].mxu0
    %v1224 = vpop.f32.mrb[0].mxu0
    %v1225 = vadd.f32 %v887, %v1224
    %v1226 = vpop.f32.mrb[0].mxu0
    %1227 = vmatprep.mubr.bf16.mxu0 %v1090
    %1228 = vmatmul.mubr.bf16.gmra.mrb[0].mxu0 %v1089
    %v1229 = vpop.f32.mrb[0].mxu0
    %v1230 = vadd.f32 %v892, %v1229
    %v1231 = vpop.f32.mrb[0].mxu0
    %v1232 = vpop.f32.mrb[0].mxu0
    %v1233 = vadd.f32 %v897, %v1232
    %v1234 = vpop.f32.mrb[0].mxu0
    %1235 = vmatprep.mubr.bf16.mxu0 %v1092
    %1236 = vmatmul.mubr.bf16.gmra.mrb[0].mxu0 %v1091
    %v1237 = vpop.f32.mrb[0].mxu0
    %v1238 = vadd.f32 %v902, %v1237
    %v1239 = vpop.f32.mrb[0].mxu0
    %v1240 = vpop.f32.mrb[0].mxu0
    %v1241 = vadd.f32 %v907, %v1240
    %v1242 = vpop.f32.mrb[0].mxu0
    %1243 = vmatprep.mubr.bf16.mxu0 %v1094
    %1244 = vmatmul.mubr.bf16.gmra.mrb[0].mxu0 %v1093
    %v1245 = vpop.f32.mrb[0].mxu0
    %v1246 = vadd.f32 %v912, %v1245
    %v1247 = vpop.f32.mrb[0].mxu0
    %v1248 = vpop.f32.mrb[0].mxu0
    %v1249 = vadd.f32 %v917, %v1248
    %v1250 = vpop.f32.mrb[0].mxu0
    %1251 = vmatprep.mubr.bf16.mxu0 %v1096
    %1252 = vmatmul.mubr.bf16.gmra.mrb[0].mxu0 %v1095
    %v1253 = vpop.f32.mrb[0].mxu0
    %v1254 = vadd.f32 %v922, %v1253
    %v1255 = vpop.f32.mrb[0].mxu0
    %v1256 = vpop.f32.mrb[0].mxu0
    %v1257 = vadd.f32 %v927, %v1256
    %v1258 = vpop.f32.mrb[0].mxu0
    %1259 = vmatprep.mubr.bf16.mxu0 %v1098
    %1260 = vmatmul.mubr.bf16.gmra.mrb[0].mxu0 %v1097
    %v1261 = vpop.f32.mrb[0].mxu0
    %v1262 = vadd.f32 %v932, %v1261
    %v1263 = vpop.f32.mrb[0].mxu0
    %v1264 = vpop.f32.mrb[0].mxu0
    %v1265 = vadd.f32 %v937, %v1264
    %v1266 = vpop.f32.mrb[0].mxu0
    %1267 = vmatprep.mubr.bf16.mxu0 %v1100
    %1268 = vmatmul.mubr.bf16.gmra.mrb[0].mxu0 %v1099
    %v1269 = vpop.f32.mrb[0].mxu0
    %v1270 = vadd.f32 %v942, %v1269
    %v1271 = vpop.f32.mrb[0].mxu0
    %v1272 = vpop.f32.mrb[0].mxu0
    %v1273 = vadd.f32 %v947, %v1272
    %v1274 = vpop.f32.mrb[0].mxu0
    %1275 = vmatprep.mubr.bf16.mxu0 %v1102
    %1276 = vmatmul.mubr.bf16.gmra.mrb[0].mxu0 %v1101
    %v1277 = vpop.f32.mrb[0].mxu0
    %v1278 = vadd.f32 %v952, %v1277
    %v1279 = vpop.f32.mrb[0].mxu0
    %v1280 = vpop.f32.mrb[0].mxu0
    %v1281 = vadd.f32 %v957, %v1280
    %v1282 = vpop.f32.mrb[0].mxu0
    %1283 = vmatprep.mubr.bf16.mxu0 %v1104
    %1284 = vmatmul.mubr.bf16.gmra.mrb[0].mxu0 %v1103
    %v1285 = vpop.f32.mrb[0].mxu0
    %v1286 = vadd.f32 %v962, %v1285
    %v1287 = vpop.f32.mrb[0].mxu0
    %v1288 = vpop.f32.mrb[0].mxu0
    %v1289 = vadd.f32 %v967, %v1288
    %v1290 = vpop.f32.mrb[0].mxu0
    %1291 = vmatprep.mubr.bf16.mxu0 %v1106
    %1292 = vmatmul.mubr.bf16.gmra.mrb[0].mxu0 %v1105
    %v1293 = vpop.f32.mrb[0].mxu0
    %v1294 = vadd.f32 %v972, %v1293
    %v1295 = vpop.f32.mrb[0].mxu0
    %v1296 = vpop.f32.mrb[0].mxu0
    %v1297 = vadd.f32 %v977, %v1296
    %v1298 = vpop.f32.mrb[0].mxu0
    %1299 = vdwg.mxu0
    %v1300 = vsub.f32 0.0, %v1174
    %v1301 = vsub.f32 0.0, %v1177
    %v1302 = vsub.f32 0.0, %v1182
    %v1303 = vsub.f32 0.0, %v1185
    %v1304 = vsub.f32 0.0, %v1190
    %v1305 = vsub.f32 0.0, %v1193
    %v1306 = vsub.f32 0.0, %v1198
    %v1307 = vsub.f32 0.0, %v1201
    %v1308 = vsub.f32 0.0, %v1206
    %v1309 = vsub.f32 0.0, %v1209
    %v1310 = vsub.f32 0.0, %v1214
    %v1311 = vsub.f32 0.0, %v1217
    %v1312 = vsub.f32 0.0, %v1222
    %v1313 = vsub.f32 0.0, %v1225
    %v1314 = vsub.f32 0.0, %v1230
    %v1315 = vsub.f32 0.0, %v1233
    %v1316 = vsub.f32 0.0, %v1238
    %v1317 = vsub.f32 0.0, %v1241
    %v1318 = vsub.f32 0.0, %v1246
    %v1319 = vsub.f32 0.0, %v1249
    %v1320 = vsub.f32 0.0, %v1254
    %v1321 = vsub.f32 0.0, %v1257
    %v1322 = vsub.f32 0.0, %v1262
    %v1323 = vsub.f32 0.0, %v1265
    %v1324 = vsub.f32 0.0, %v1270
    %v1325 = vsub.f32 0.0, %v1273
    %v1326 = vsub.f32 0.0, %v1278
    %v1327 = vsub.f32 0.0, %v1281
    %v1328 = vsub.f32 0.0, %v1286
    %v1329 = vsub.f32 0.0, %v1289
    %v1330 = vsub.f32 0.0, %v1294
    %v1331 = vsub.f32 0.0, %v1297
    %v1332 = vmul.f32 %v1300, 1.442695
    %v1333 = vpow.pop %v1332
    %v1334 = vmul.f32 %v1301, 1.442695
    %v1335 = vpow.pop %v1334
    %v1336 = vmul.f32 %v1302, 1.442695
    %v1337 = vpow.pop %v1336
    %v1338 = vmul.f32 %v1303, 1.442695
    %v1339 = vpow.pop %v1338
    %v1340 = vmul.f32 %v1304, 1.442695
    %v1341 = vpow.pop %v1340
    %v1342 = vmul.f32 %v1305, 1.442695
    %v1343 = vpow.pop %v1342
    %v1344 = vmul.f32 %v1306, 1.442695
    %v1345 = vpow.pop %v1344
    %v1346 = vmul.f32 %v1307, 1.442695
    %v1347 = vpow.pop %v1346
    %v1348 = vmul.f32 %v1308, 1.442695
    %v1349 = vpow.pop %v1348
    %v1350 = vmul.f32 %v1309, 1.442695
    %v1351 = vpow.pop %v1350
    %v1352 = vmul.f32 %v1310, 1.442695
    %v1353 = vpow.pop %v1352
    %v1354 = vmul.f32 %v1311, 1.442695
    %v1355 = vpow.pop %v1354
    %v1356 = vmul.f32 %v1312, 1.442695
    %v1357 = vpow.pop %v1356
    %v1358 = vmul.f32 %v1313, 1.442695
    %v1359 = vpow.pop %v1358
    %v1360 = vmul.f32 %v1314, 1.442695
    %v1361 = vpow.pop %v1360
    %v1362 = vmul.f32 %v1315, 1.442695
    %v1363 = vpow.pop %v1362
    %v1364 = vmul.f32 %v1316, 1.442695
    %v1365 = vpow.pop %v1364
    %v1366 = vmul.f32 %v1317, 1.442695
    %v1367 = vpow.pop %v1366
    %v1368 = vmul.f32 %v1318, 1.442695
    %v1369 = vpow.pop %v1368
    %v1370 = vmul.f32 %v1319, 1.442695
    %v1371 = vpow.pop %v1370
    %v1372 = vmul.f32 %v1320, 1.442695
    %v1373 = vpow.pop %v1372
    %v1374 = vmul.f32 %v1321, 1.442695
    %v1375 = vpow.pop %v1374
    %v1376 = vmul.f32 %v1322, 1.442695
    %v1377 = vpow.pop %v1376
    %v1378 = vmul.f32 %v1323, 1.442695
    %v1379 = vpow.pop %v1378
    %v1380 = vmul.f32 %v1324, 1.442695
    %v1381 = vpow.pop %v1380
    %v1382 = vmul.f32 %v1325, 1.442695
    %v1383 = vpow.pop %v1382
    %v1384 = vmul.f32 %v1326, 1.442695
    %v1385 = vpow.pop %v1384
    %v1386 = vmul.f32 %v1327, 1.442695
    %v1387 = vpow.pop %v1386
    %v1388 = vmul.f32 %v1328, 1.442695
    %v1389 = vpow.pop %v1388
    %v1390 = vmul.f32 %v1329, 1.442695
    %v1391 = vpow.pop %v1390
    %v1392 = vmul.f32 %v1330, 1.442695
    %v1393 = vpow.pop %v1392
    %v1394 = vmul.f32 %v1331, 1.442695
    %v1395 = vpow.pop %v1394
    %v1396 = vadd.f32 %v1333, 1.0
    %v1397 = vadd.f32 %v1335, 1.0
    %v1398 = vadd.f32 %v1337, 1.0
    %v1399 = vadd.f32 %v1339, 1.0
    %v1400 = vadd.f32 %v1341, 1.0
    %v1401 = vadd.f32 %v1343, 1.0
    %v1402 = vadd.f32 %v1345, 1.0
    %v1403 = vadd.f32 %v1347, 1.0
    %v1404 = vadd.f32 %v1349, 1.0
    %v1405 = vadd.f32 %v1351, 1.0
    %v1406 = vadd.f32 %v1353, 1.0
    %v1407 = vadd.f32 %v1355, 1.0
    %v1408 = vadd.f32 %v1357, 1.0
    %v1409 = vadd.f32 %v1359, 1.0
    %v1410 = vadd.f32 %v1361, 1.0
    %v1411 = vadd.f32 %v1363, 1.0
    %v1412 = vadd.f32 %v1365, 1.0
    %v1413 = vadd.f32 %v1367, 1.0
    %v1414 = vadd.f32 %v1369, 1.0
    %v1415 = vadd.f32 %v1371, 1.0
    %v1416 = vadd.f32 %v1373, 1.0
    %v1417 = vadd.f32 %v1375, 1.0
    %v1418 = vadd.f32 %v1377, 1.0
    %v1419 = vadd.f32 %v1379, 1.0
    %v1420 = vadd.f32 %v1381, 1.0
    %v1421 = vadd.f32 %v1383, 1.0
    %v1422 = vadd.f32 %v1385, 1.0
    %v1423 = vadd.f32 %v1387, 1.0
    %v1424 = vadd.f32 %v1389, 1.0
    %v1425 = vadd.f32 %v1391, 1.0
    %v1426 = vadd.f32 %v1393, 1.0
    %v1427 = vadd.f32 %v1395, 1.0
    %v1428 = vrcp.pop %v1396
    %v1429 = vrcp.pop %v1397
    %v1430 = vrcp.pop %v1398
    %v1431 = vrcp.pop %v1399
    %v1432 = vrcp.pop %v1400
    %v1433 = vrcp.pop %v1401
    %v1434 = vrcp.pop %v1402
    %v1435 = vrcp.pop %v1403
    %v1436 = vrcp.pop %v1404
    %v1437 = vrcp.pop %v1405
    %v1438 = vrcp.pop %v1406
    %v1439 = vrcp.pop %v1407
    %v1440 = vrcp.pop %v1408
    %v1441 = vrcp.pop %v1409
    %v1442 = vrcp.pop %v1410
    %v1443 = vrcp.pop %v1411
    %v1444 = vrcp.pop %v1412
    %v1445 = vrcp.pop %v1413
    %v1446 = vrcp.pop %v1414
    %v1447 = vrcp.pop %v1415
    %v1448 = vrcp.pop %v1416
    %v1449 = vrcp.pop %v1417
    %v1450 = vrcp.pop %v1418
    %v1451 = vrcp.pop %v1419
    %v1452 = vrcp.pop %v1420
    %v1453 = vrcp.pop %v1421
    %v1454 = vrcp.pop %v1422
    %v1455 = vrcp.pop %v1423
    %v1456 = vrcp.pop %v1424
    %v1457 = vrcp.pop %v1425
    %v1458 = vrcp.pop %v1426
    %v1459 = vrcp.pop %v1427
    %v1460 = vmul.f32 %v1174, %v1428
    %v1461 = vmul.f32 %v1177, %v1429
    %v1462 = vmul.f32 %v1182, %v1430
    %v1463 = vmul.f32 %v1185, %v1431
    %v1464 = vmul.f32 %v1190, %v1432
    %v1465 = vmul.f32 %v1193, %v1433
    %v1466 = vmul.f32 %v1198, %v1434
    %v1467 = vmul.f32 %v1201, %v1435
    %v1468 = vmul.f32 %v1206, %v1436
    %v1469 = vmul.f32 %v1209, %v1437
    %v1470 = vmul.f32 %v1214, %v1438
    %v1471 = vmul.f32 %v1217, %v1439
    %v1472 = vmul.f32 %v1222, %v1440
    %v1473 = vmul.f32 %v1225, %v1441
    %v1474 = vmul.f32 %v1230, %v1442
    %v1475 = vmul.f32 %v1233, %v1443
    %v1476 = vmul.f32 %v1238, %v1444
    %v1477 = vmul.f32 %v1241, %v1445
    %v1478 = vmul.f32 %v1246, %v1446
    %v1479 = vmul.f32 %v1249, %v1447
    %v1480 = vmul.f32 %v1254, %v1448
    %v1481 = vmul.f32 %v1257, %v1449
    %v1482 = vmul.f32 %v1262, %v1450
    %v1483 = vmul.f32 %v1265, %v1451
    %v1484 = vmul.f32 %v1270, %v1452
    %v1485 = vmul.f32 %v1273, %v1453
    %v1486 = vmul.f32 %v1278, %v1454
    %v1487 = vmul.f32 %v1281, %v1455
    %v1488 = vmul.f32 %v1286, %v1456
    %v1489 = vmul.f32 %v1289, %v1457
    %v1490 = vmul.f32 %v1294, %v1458
    %v1491 = vmul.f32 %v1297, %v1459
    %v1492 = vld [vmem:[%s5] sm:$0xff]
    %v1493 = vld [vmem:[%s5 + $0x8] sm:$0xff]
    %v1494 = vld [vmem:[%s5 + $0x10] sm:$0xff]
    %v1495 = vld [vmem:[%s5 + $0x18] sm:$0xff]
    %v1496 = vld [vmem:[%s5 + $0x20] sm:$0xff]
    %v1497 = vld [vmem:[%s5 + $0x28] sm:$0xff]
    %v1498 = vld [vmem:[%s5 + $0x30] sm:$0xff]
    %v1499 = vld [vmem:[%s5 + $0x38] sm:$0xff]
    %v1500 = vld [vmem:[%s5 + $0x40] sm:$0xff]
    %v1501 = vld [vmem:[%s5 + $0x48] sm:$0xff]
    %v1502 = vld [vmem:[%s5 + $0x50] sm:$0xff]
    %v1503 = vld [vmem:[%s5 + $0x58] sm:$0xff]
    %v1504 = vld [vmem:[%s5 + $0x60] sm:$0xff]
    %v1505 = vld [vmem:[%s5 + $0x68] sm:$0xff]
    %v1506 = vld [vmem:[%s5 + $0x70] sm:$0xff]
    %v1507 = vld [vmem:[%s5 + $0x78] sm:$0xff]
    %v1508 = vld [vmem:[%s5 + $0x80] sm:$0xff]
    %v1509 = vld [vmem:[%s5 + $0x88] sm:$0xff]
    %v1510 = vld [vmem:[%s5 + $0x90] sm:$0xff]
    %v1511 = vld [vmem:[%s5 + $0x98] sm:$0xff]
    %v1512 = vld [vmem:[%s5 + $0xa0] sm:$0xff]
    %v1513 = vld [vmem:[%s5 + $0xa8] sm:$0xff]
    %v1514 = vld [vmem:[%s5 + $0xb0] sm:$0xff]
    %v1515 = vld [vmem:[%s5 + $0xb8] sm:$0xff]
    %v1516 = vld [vmem:[%s5 + $0xc0] sm:$0xff]
    %v1517 = vld [vmem:[%s5 + $0xc8] sm:$0xff]
    %v1518 = vld [vmem:[%s5 + $0xd0] sm:$0xff]
    %v1519 = vld [vmem:[%s5 + $0xd8] sm:$0xff]
    %v1520 = vld [vmem:[%s5 + $0xe0] sm:$0xff]
    %v1521 = vld [vmem:[%s5 + $0xe8] sm:$0xff]
    %v1522 = vld [vmem:[%s5 + $0xf0] sm:$0xff]
    %v1523 = vld [vmem:[%s5 + $0xf8] sm:$0xff]
    %1525 = vset.pattern.permute.xlu0 0
    %1526 = vperm.xlu0 %1525, %v1492
    %v1527 = vpop.permute.xlu0 %1526
    %1530 = vset.pattern.permute.xlu0 0
    %1531 = vperm.xlu0 %1530, %v1493
    %v1532 = vpop.permute.xlu0 %1531
    %1535 = vset.pattern.permute.xlu0 0
    %1536 = vperm.xlu0 %1535, %v1494
    %v1537 = vpop.permute.xlu0 %1536
    %1540 = vset.pattern.permute.xlu0 0
    %1541 = vperm.xlu0 %1540, %v1495
    %v1542 = vpop.permute.xlu0 %1541
    %1545 = vset.pattern.permute.xlu0 0
    %1546 = vperm.xlu0 %1545, %v1496
    %v1547 = vpop.permute.xlu0 %1546
    %1550 = vset.pattern.permute.xlu0 0
    %1551 = vperm.xlu0 %1550, %v1497
    %v1552 = vpop.permute.xlu0 %1551
    %1555 = vset.pattern.permute.xlu0 0
    %1556 = vperm.xlu0 %1555, %v1498
    %v1557 = vpop.permute.xlu0 %1556
    %1560 = vset.pattern.permute.xlu0 0
    %1561 = vperm.xlu0 %1560, %v1499
    %v1562 = vpop.permute.xlu0 %1561
    %1565 = vset.pattern.permute.xlu0 0
    %1566 = vperm.xlu0 %1565, %v1500
    %v1567 = vpop.permute.xlu0 %1566
    %1570 = vset.pattern.permute.xlu0 0
    %1571 = vperm.xlu0 %1570, %v1501
    %v1572 = vpop.permute.xlu0 %1571
    %1575 = vset.pattern.permute.xlu0 0
    %1576 = vperm.xlu0 %1575, %v1502
    %v1577 = vpop.permute.xlu0 %1576
    %1580 = vset.pattern.permute.xlu0 0
    %1581 = vperm.xlu0 %1580, %v1503
    %v1582 = vpop.permute.xlu0 %1581
    %1585 = vset.pattern.permute.xlu0 0
    %1586 = vperm.xlu0 %1585, %v1504
    %v1587 = vpop.permute.xlu0 %1586
    %1590 = vset.pattern.permute.xlu0 0
    %1591 = vperm.xlu0 %1590, %v1505
    %v1592 = vpop.permute.xlu0 %1591
    %1595 = vset.pattern.permute.xlu0 0
    %1596 = vperm.xlu0 %1595, %v1506
    %v1597 = vpop.permute.xlu0 %1596
    %1600 = vset.pattern.permute.xlu0 0
    %1601 = vperm.xlu0 %1600, %v1507
    %v1602 = vpop.permute.xlu0 %1601
    %1605 = vset.pattern.permute.xlu0 0
    %1606 = vperm.xlu0 %1605, %v1508
    %v1607 = vpop.permute.xlu0 %1606
    %1610 = vset.pattern.permute.xlu0 0
    %1611 = vperm.xlu0 %1610, %v1509
    %v1612 = vpop.permute.xlu0 %1611
    %1615 = vset.pattern.permute.xlu0 0
    %1616 = vperm.xlu0 %1615, %v1510
    %v1617 = vpop.permute.xlu0 %1616
    %1620 = vset.pattern.permute.xlu0 0
    %1621 = vperm.xlu0 %1620, %v1511
    %v1622 = vpop.permute.xlu0 %1621
    %1625 = vset.pattern.permute.xlu0 0
    %1626 = vperm.xlu0 %1625, %v1512
    %v1627 = vpop.permute.xlu0 %1626
    %1630 = vset.pattern.permute.xlu0 0
    %1631 = vperm.xlu0 %1630, %v1513
    %v1632 = vpop.permute.xlu0 %1631
    %1635 = vset.pattern.permute.xlu0 0
    %1636 = vperm.xlu0 %1635, %v1514
    %v1637 = vpop.permute.xlu0 %1636
    %1640 = vset.pattern.permute.xlu0 0
    %1641 = vperm.xlu0 %1640, %v1515
    %v1642 = vpop.permute.xlu0 %1641
    %1645 = vset.pattern.permute.xlu0 0
    %1646 = vperm.xlu0 %1645, %v1516
    %v1647 = vpop.permute.xlu0 %1646
    %1650 = vset.pattern.permute.xlu0 0
    %1651 = vperm.xlu0 %1650, %v1517
    %v1652 = vpop.permute.xlu0 %1651
    %1655 = vset.pattern.permute.xlu0 0
    %1656 = vperm.xlu0 %1655, %v1518
    %v1657 = vpop.permute.xlu0 %1656
    %1660 = vset.pattern.permute.xlu0 0
    %1661 = vperm.xlu0 %1660, %v1519
    %v1662 = vpop.permute.xlu0 %1661
    %1665 = vset.pattern.permute.xlu0 0
    %1666 = vperm.xlu0 %1665, %v1520
    %v1667 = vpop.permute.xlu0 %1666
    %1670 = vset.pattern.permute.xlu0 0
    %1671 = vperm.xlu0 %1670, %v1521
    %v1672 = vpop.permute.xlu0 %1671
    %1675 = vset.pattern.permute.xlu0 0
    %1676 = vperm.xlu0 %1675, %v1522
    %v1677 = vpop.permute.xlu0 %1676
    %1680 = vset.pattern.permute.xlu0 0
    %1681 = vperm.xlu0 %1680, %v1523
    %v1682 = vpop.permute.xlu0 %1681
    %v1684 = vmul.f32 %v1460, %v1527
    %v1685 = vmul.f32 %v1461, %v1532
    %v1686 = vmul.f32 %v1462, %v1537
    %v1687 = vmul.f32 %v1463, %v1542
    %v1688 = vmul.f32 %v1464, %v1547
    %v1689 = vmul.f32 %v1465, %v1552
    %v1690 = vmul.f32 %v1466, %v1557
    %v1691 = vmul.f32 %v1467, %v1562
    %v1692 = vmul.f32 %v1468, %v1567
    %v1693 = vmul.f32 %v1469, %v1572
    %v1694 = vmul.f32 %v1470, %v1577
    %v1695 = vmul.f32 %v1471, %v1582
    %v1696 = vmul.f32 %v1472, %v1587
    %v1697 = vmul.f32 %v1473, %v1592
    %v1698 = vmul.f32 %v1474, %v1597
    %v1699 = vmul.f32 %v1475, %v1602
    %v1700 = vmul.f32 %v1476, %v1607
    %v1701 = vmul.f32 %v1477, %v1612
    %v1702 = vmul.f32 %v1478, %v1617
    %v1703 = vmul.f32 %v1479, %v1622
    %v1704 = vmul.f32 %v1480, %v1627
    %v1705 = vmul.f32 %v1481, %v1632
    %v1706 = vmul.f32 %v1482, %v1637
    %v1707 = vmul.f32 %v1483, %v1642
    %v1708 = vmul.f32 %v1484, %v1647
    %v1709 = vmul.f32 %v1485, %v1652
    %v1710 = vmul.f32 %v1486, %v1657
    %v1711 = vmul.f32 %v1487, %v1662
    %v1712 = vmul.f32 %v1488, %v1667
    %v1713 = vmul.f32 %v1489, %v1672
    %v1714 = vmul.f32 %v1490, %v1677
    %v1715 = vmul.f32 %v1491, %v1682
    %v1716 = vadd.f32 %v1684, %v1685
    %v1717 = vadd.f32 %v1716, %v1686
    %v1718 = vadd.f32 %v1717, %v1687
    %v1719 = vadd.f32 %v1718, %v1688
    %v1720 = vadd.f32 %v1719, %v1689
    %v1721 = vadd.f32 %v1720, %v1690
    %v1722 = vadd.f32 %v1721, %v1691
    %v1723 = vadd.f32 %v1722, %v1692
    %v1724 = vadd.f32 %v1723, %v1693
    %v1725 = vadd.f32 %v1724, %v1694
    %v1726 = vadd.f32 %v1725, %v1695
    %v1727 = vadd.f32 %v1726, %v1696
    %v1728 = vadd.f32 %v1727, %v1697
    %v1729 = vadd.f32 %v1728, %v1698
    %v1730 = vadd.f32 %v1729, %v1699
    %v1731 = vadd.f32 %v1730, %v1700
    %v1732 = vadd.f32 %v1731, %v1701
    %v1733 = vadd.f32 %v1732, %v1702
    %v1734 = vadd.f32 %v1733, %v1703
    %v1735 = vadd.f32 %v1734, %v1704
    %v1736 = vadd.f32 %v1735, %v1705
    %v1737 = vadd.f32 %v1736, %v1706
    %v1738 = vadd.f32 %v1737, %v1707
    %v1739 = vadd.f32 %v1738, %v1708
    %v1740 = vadd.f32 %v1739, %v1709
    %v1741 = vadd.f32 %v1740, %v1710
    %v1742 = vadd.f32 %v1741, %v1711
    %v1743 = vadd.f32 %v1742, %v1712
    %v1744 = vadd.f32 %v1743, %v1713
    %v1745 = vadd.f32 %v1744, %v1714
    %v1746 = vadd.f32 %v1745, %v1715
    %v1747 = vrot.slane %v1746, 4
    %v1748 = vadd.f32 %v1746, %v1747
    %v1749 = vrot.slane %v1748, 2
    %v1750 = vadd.f32 %v1748, %v1749
    %v1751 = vrot.slane %v1750, 1
    %v1752 = vadd.f32 %v1750, %v1751
    %v1753 = vld [vmem:[#allocation2] sm:$0x1]
    %1755 = vset.pattern.permute.xlu0 0
    %1756 = vperm.xlu0 %1755, %v1753
    %v1757 = vpop.permute.xlu0 %1756
    %v1759 = vlaneseq
    %v1760 = vshrl.u32 %v1759, 7
    %v1761 = vsub.s32 0, %v1760
    %v1762 = vrot.slane %v1757, %v1761
    %v1763 = vadd.f32 %v1752, %v1762
    %1764 = vst [vmem:[#allocation3] sm:$0x1] %v1763
    // Predicated region
    $region30: #{tpu_custom_call.1} parent=1 // pred_check
      _
    $region31: #{tpu_custom_call.1} parent=1 // pred_check_branch
      %1766 = sbr.rel (0) target = $region33
    $region32: #{tpu_custom_call.1} parent=1 // pred_region
      %s1768 = ssub.s32 16, 16
      %1769 = vsyncadd [#allocation4], %s1768
      %s1771 = sshll.u32 [#allocation3], 4
      %s1772 = int_to_ptr.vmem [resolvable:$true] %s1771
      %1774 = dma.vmem_to_hbm [thread:$0]  %s1772, 16, %s7, [#allocation4]
    $region33: #{tpu_custom_call.1} parent=1 // pred_fallthru
      _
    // Predicated region
    $region34: #{tpu_custom_call.1} parent=1 // pred_check
      _
    $region35: #{tpu_custom_call.1} parent=1 // pred_check_branch
      %1776 = sbr.rel (0) target = $region37
    $region36: #{tpu_custom_call.1} parent=1 // pred_region
      %1777 = dma.done [#allocation4], 16
    $region37: #{tpu_custom_call.1} parent=1 // pred_fallthru
      _
    %1778 = vsyncpa [#allocation4], 1

</llo_original>
